<compile_context>
chip_gen: v6e
topology: v6e:2x2x1
jax: 0.10.0
libtpu: 0.0.40
codegen_flags: <defaults>
</compile_context>

<pallas_src>
import numpy as np
import jax
import jax.numpy as jnp
from jax import lax
from jax.experimental import pallas as pl
from jax.experimental.pallas import tpu as pltpu

NUM_CLASSES = 10


# ------------------------------ fused kernel -------------------------------- #

def make_simple_cnn_kernel(H1, W1, C1, C2):
    """H1, W1: spatial size after the first 2x2 pool; C1/C2: conv1/conv2 channels."""
    W1p = W1 + 2                        # padded row width for conv2
    Q1 = H1 * W1                        # pooled positions after conv1
    QR = (H1 - 1) * W1p + W1            # row-span of conv2 outputs in padded layout
    BR = QR - 1 - W1p                   # row-span after the shifted 2x2 max

    def kernel(p1_ref, w1_ref, b1_ref, scat_ref, w2_ref, b2_ref, sel_ref,
               fw1_ref, fb1_ref, fw2_ref, fb2_ref, o_ref):
        # ---- conv1 + bias + ReLU + 2x2 max-pool: ONE MXU matmul over 4 phases ----
        z1 = jnp.dot(p1_ref[0], w1_ref[...],
                     preferred_element_type=jnp.float32)            # (4*Q1, C1)
        m1 = jnp.maximum(jnp.maximum(z1[0:Q1], z1[Q1:2 * Q1]),
                         jnp.maximum(z1[2 * Q1:3 * Q1], z1[3 * Q1:4 * Q1]))
        y1 = jnp.maximum(m1 + b1_ref[...], 0.0)                      # (Q1, C1)

        # ---- scatter y1 into zero-padded (H1+2, W1+2) layout (rows=space, lanes=C)
        ypad = jnp.dot(scat_ref[...], y1,
                       preferred_element_type=jnp.float32)           # (P, C1)

        # ---- conv2 (3x3, SAME) as 9 shifted-tap matmuls, f32 accumulate ----
        z2 = jnp.zeros((QR, C2), jnp.float32)
        for dy in range(3):
            for dx in range(3):
                t = (dy - 1) * W1p + (dx - 1)
                start = W1p + 1 + t
                xt = ypad[start:start + QR, :].astype(w2_ref.dtype)  # (QR, C1)
                wt = w2_ref[(dy * 3 + dx) * C1:(dy * 3 + dx + 1) * C1, :]
                z2 = z2 + jnp.dot(xt, wt, preferred_element_type=jnp.float32)

        # ---- 2x2 max-pool via shifted maxima, then (hoisted) bias + ReLU ----
        m_w = jnp.maximum(z2[0:QR - 1], z2[1:QR])                    # pool over width
        m_hw = jnp.maximum(m_w[0:BR], m_w[W1p:W1p + BR])             # pool over height
        act = jnp.maximum(m_hw + b2_ref[...], 0.0)                   # (BR, C2)

        # ---- AdaptiveAvgPool2d((1,1)): constant selection row * act (MXU) ----
        feat = jnp.dot(sel_ref[...], act,
                       preferred_element_type=jnp.float32)           # (1, C2)

        # ---- classifier head (f32), lane-dense 128-wide output ----
        h = jnp.maximum(jnp.dot(feat, fw1_ref[...],
                                preferred_element_type=jnp.float32) + fb1_ref[...],
                        0.0)                                          # (1, 128)
        out = jnp.dot(h, fw2_ref[...],
                      preferred_element_type=jnp.float32) + fb2_ref[...]
        o_ref[0] = out.astype(o_ref.dtype)                            # (1, NCP)

    return kernel


# --------------------------- plain-JAX glue --------------------------------- #

def im2col_pool_groups(x_nhwc, k=3, pad=1):
    """Conv patches regrouped by 2x2 max-pool phase, flattened phase-major.
    Returns (N, 4*(H/2)*(W/2), k*k*C); patch features ordered (dy, dx, c)."""
    N, H, W, C = x_nhwc.shape
    xp = jnp.pad(x_nhwc, ((0, 0), (pad, pad), (pad, pad), (0, 0)))
    cols = [xp[:, dy:dy + H, dx:dx + W, :] for dy in range(k) for dx in range(k)]
    p = jnp.stack(cols, axis=3).reshape(N, H, W, k * k * C)
    p = p.reshape(N, H // 2, 2, W // 2, 2, k * k * C)
    p = p.transpose(0, 2, 4, 1, 3, 5)                 # (N, 2, 2, H/2, W/2, K)
    return p.reshape(N, 4 * (H // 2) * (W // 2), k * k * C)


def conv_w_to_mat(w_oihw):
    """PyTorch (Cout, Cin, kh, kw) -> (kh*kw*Cin, Cout), matching (dy, dx, c) order."""
    cout = w_oihw.shape[0]
    return jnp.transpose(w_oihw, (2, 3, 1, 0)).reshape(-1, cout)


def _conv2_constants(H1, W1):
    """Constant 0/1 scatter matrix (pad y1 spatially) and avg-pool selection row."""
    W1p = W1 + 2
    P = (H1 + 2) * W1p
    Q1 = H1 * W1
    QR = (H1 - 1) * W1p + W1
    BR = QR - 1 - W1p
    S = np.zeros((P, Q1), np.float32)
    for h in range(H1):
        for w in range(W1):
            S[(h + 1) * W1p + (w + 1), h * W1 + w] = 1.0
    sel = np.zeros((1, BR), np.float32)
    inv = 1.0 / ((H1 // 2) * (W1 // 2))
    for h2 in range(H1 // 2):
        for w2 in range(W1 // 2):
            sel[0, 2 * h2 * W1p + 2 * w2] = inv
    return jnp.asarray(S), jnp.asarray(sel)


def simple_cnn_forward(x_nchw, params):
    N, _, H, W = x_nchw.shape
    assert H % 4 == 0 and W % 4 == 0, "spatial dims must be divisible by 4"
    H1, W1 = H // 2, W // 2
    Q1 = H1 * W1
    C1 = params["conv1_w"].shape[0]                   # 32
    C2 = params["conv2_w"].shape[0]                   # 64
    NC = params["fc2_w"].shape[0]
    NCP = ((NC + 127) // 128) * 128                   # lane-dense padded class dim
    HFC = params["fc1_w"].shape[0]                    # 128

    x = jnp.transpose(x_nchw, (0, 2, 3, 1))           # NCHW -> NHWC
    p1 = im2col_pool_groups(x).astype(jnp.bfloat16)   # (N, 4*Q1, 9*Cin)
    K1 = p1.shape[-1]

    w1m = conv_w_to_mat(params["conv1_w"]).astype(jnp.bfloat16)   # (K1, C1)
    b1 = params["conv1_b"].reshape(1, C1).astype(jnp.float32)
    w2m = conv_w_to_mat(params["conv2_w"]).astype(jnp.bfloat16)   # (9*C1, C2)
    b2 = params["conv2_b"].reshape(1, C2).astype(jnp.float32)
    S, sel = _conv2_constants(H1, W1)
    P, BR = S.shape[0], sel.shape[1]

    fw1 = params["fc1_w"].T.astype(jnp.float32)                   # (C2, HFC)
    fb1 = params["fc1_b"].reshape(1, HFC).astype(jnp.float32)
    fw2 = jnp.zeros((HFC, NCP), jnp.float32).at[:, :NC].set(params["fc2_w"].T)
    fb2 = jnp.zeros((1, NCP), jnp.float32).at[:, :NC].set(params["fc2_b"].reshape(1, NC))

    kernel = make_simple_cnn_kernel(H1, W1, C1, C2)

    out_p = pl.pallas_call(
        kernel,
        out_shape=jax.ShapeDtypeStruct((N, 1, NCP), jnp.float32),
        grid_spec=pltpu.PrefetchScalarGridSpec(
            num_scalar_prefetch=0,
            grid=(N,),
            in_specs=[
                pl.BlockSpec((1, 4 * Q1, K1), lambda n: (n, 0, 0)),   # conv1 patches
                pl.BlockSpec((K1, C1), lambda n: (0, 0)),             # conv1 weight
                pl.BlockSpec((1, C1), lambda n: (0, 0)),              # conv1 bias
                pl.BlockSpec((P, Q1), lambda n: (0, 0)),              # pad-scatter
                pl.BlockSpec((9 * C1, C2), lambda n: (0, 0)),         # conv2 weight
                pl.BlockSpec((1, C2), lambda n: (0, 0)),              # conv2 bias
                pl.BlockSpec((1, BR), lambda n: (0, 0)),              # avg-pool select
                pl.BlockSpec((C2, HFC), lambda n: (0, 0)),            # fc1 weight
                pl.BlockSpec((1, HFC), lambda n: (0, 0)),             # fc1 bias
                pl.BlockSpec((HFC, NCP), lambda n: (0, 0)),           # fc2 weight (pad)
                pl.BlockSpec((1, NCP), lambda n: (0, 0)),             # fc2 bias (pad)
            ],
            out_specs=pl.BlockSpec((1, 1, NCP), lambda n: (n, 0, 0)),
        ),
        compiler_params=pltpu.CompilerParams(
            dimension_semantics=("parallel",)),   # v7x: samples split across TCs
    )(p1, w1m, b1, S, w2m, b2, sel, fw1, fb1, fw2, fb2)

    return out_p.reshape(N, NCP)[:, :NC]


# ------------------------ pure-JAX reference -------------------------------- #

def reference_forward(x_nchw, params):
    x = jnp.transpose(x_nchw, (0, 2, 3, 1))
    dn = ("NHWC", "HWIO", "NHWC")

    def conv(x, w_oihw, b):
        w = jnp.transpose(w_oihw, (2, 3, 1, 0))
        return lax.conv_general_dilated(x, w, (1, 1), "SAME", dimension_numbers=dn) + b

    def maxpool2(x):
        N, H, W, C = x.shape
        return x.reshape(N, H // 2, 2, W // 2, 2, C).max(axis=(2, 4))

    y = maxpool2(jnp.maximum(conv(x, params["conv1_w"], params["conv1_b"]), 0.0))
    y = maxpool2(jnp.maximum(conv(y, params["conv2_w"], params["conv2_b"]), 0.0))
    feat = jnp.mean(y, axis=(1, 2))                    # (N, 64)
    h = jnp.maximum(feat @ params["fc1_w"].T + params["fc1_b"], 0.0)
    return h @ params["fc2_w"].T + params["fc2_b"]


# --------------------------------- main -------------------------------------- #

def init_params(key):
    ks = jax.random.split(key, 8)

    def u(k, shape, fan_in):
        bound = 1.0 / np.sqrt(fan_in)
        return jax.random.uniform(k, shape, jnp.float32, -bound, bound)

    return {
        "conv1_w": u(ks[0], (32, 3, 3, 3), 3 * 9),
        "conv1_b": u(ks[1], (32,), 3 * 9),
        "conv2_w": u(ks[2], (64, 32, 3, 3), 32 * 9),
        "conv2_b": u(ks[3], (64,), 32 * 9),
        "fc1_w":  u(ks[4], (128, 64), 64),
        "fc1_b":  u(ks[5], (128,), 64),
        "fc2_w":  u(ks[6], (NUM_CLASSES, 128), 128),
        "fc2_b":  u(ks[7], (NUM_CLASSES,), 128),
    }


if __name__ == "__main__":
    key = jax.random.PRNGKey(0)
    kp, kx = jax.random.split(key)
    params = init_params(kp)

    # small shapes consistent with the module: batch=2, 3 channels, 16x16 spatial
    x = jax.random.normal(kx, (2, 3, 16, 16), jnp.float32)

    out = jax.block_until_ready(jax.jit(simple_cnn_forward)(x, params))
    ref = jax.block_until_ready(reference_forward(x, params))

    assert out.shape == (2, NUM_CLASSES), out.shape
    np.testing.assert_allclose(np.asarray(out), np.asarray(ref), rtol=1e-2, atol=1e-2)
    print("KERNEL_OK")
</pallas_src>

<mosaic_0001>
module attributes {stable_mosaic.version = 11 : i64} {
  func.func @kernel(%arg0: i32, %arg1: memref<1x256x27xbf16, #tpu.memory_space<vmem>>, %arg2: memref<27x32xbf16, #tpu.memory_space<vmem>>, %arg3: memref<1x32xf32, #tpu.memory_space<vmem>>, %arg4: memref<100x64xf32, #tpu.memory_space<vmem>>, %arg5: memref<288x64xbf16, #tpu.memory_space<vmem>>, %arg6: memref<1x64xf32, #tpu.memory_space<vmem>>, %arg7: memref<1x67xf32, #tpu.memory_space<vmem>>, %arg8: memref<64x128xf32, #tpu.memory_space<vmem>>, %arg9: memref<1x128xf32, #tpu.memory_space<vmem>>, %arg10: memref<128x128xf32, #tpu.memory_space<vmem>>, %arg11: memref<1x128xf32, #tpu.memory_space<vmem>>, %arg12: memref<1x1x128xf32, #tpu.memory_space<vmem>>) attributes {dimension_semantics = [#tpu.dimension_semantics<parallel>], iteration_bounds = array<i64: 2>, scalar_prefetch = 0 : i64, scratch_operands = 0 : i64, tpu.core_type = #tpu.core_type<tc>, window_params = [{transform_indices = @transform_0, window_bounds = array<i64: 1, 256, 27>}, {pipeline_mode = #tpu.pipeline_mode<synchronous>, transform_indices = @transform_1, window_bounds = array<i64: 27, 32>}, {pipeline_mode = #tpu.pipeline_mode<synchronous>, transform_indices = @transform_2, window_bounds = array<i64: 1, 32>}, {pipeline_mode = #tpu.pipeline_mode<synchronous>, transform_indices = @transform_3, window_bounds = array<i64: 100, 64>}, {pipeline_mode = #tpu.pipeline_mode<synchronous>, transform_indices = @transform_4, window_bounds = array<i64: 288, 64>}, {pipeline_mode = #tpu.pipeline_mode<synchronous>, transform_indices = @transform_5, window_bounds = array<i64: 1, 64>}, {pipeline_mode = #tpu.pipeline_mode<synchronous>, transform_indices = @transform_6, window_bounds = array<i64: 1, 67>}, {pipeline_mode = #tpu.pipeline_mode<synchronous>, transform_indices = @transform_7, window_bounds = array<i64: 64, 128>}, {pipeline_mode = #tpu.pipeline_mode<synchronous>, transform_indices = @transform_8, window_bounds = array<i64: 1, 128>}, {pipeline_mode = #tpu.pipeline_mode<synchronous>, transform_indices = @transform_9, window_bounds = array<i64: 128, 128>}, {pipeline_mode = #tpu.pipeline_mode<synchronous>, transform_indices = @transform_10, window_bounds = array<i64: 1, 128>}, {transform_indices = @transform_11, window_bounds = array<i64: 1, 1, 128>}]} {
    %c0 = arith.constant 0 : index
    %c0_0 = arith.constant 0 : index
    %c0_1 = arith.constant 0 : index
    %0 = vector.load %arg1[%c0, %c0_0, %c0_1] : memref<1x256x27xbf16, #tpu.memory_space<vmem>>, vector<1x256x27xbf16>
    %1 = vector.shape_cast %0 : vector<1x256x27xbf16> to vector<256x27xbf16>
    %c0_2 = arith.constant 0 : index
    %c0_3 = arith.constant 0 : index
    %2 = vector.load %arg2[%c0_2, %c0_3] : memref<27x32xbf16, #tpu.memory_space<vmem>>, vector<27x32xbf16>
    %cst = arith.constant dense<0.000000e+00> : vector<256x32xf32>
    %3 = tpu.matmul %1, %2, %cst {dimension_numbers = #tpu.dot_dimension_numbers<[1], [0], [0], [1], [0, 0, 1, 1], [], []>} : vector<256x27xbf16>, vector<27x32xbf16>, vector<256x32xf32> -> vector<256x32xf32>
    %4 = vector.extract_strided_slice %3 {offsets = [0, 0], sizes = [64, 32], strides = [1, 1]} : vector<256x32xf32> to vector<64x32xf32>
    %5 = vector.extract_strided_slice %3 {offsets = [64, 0], sizes = [64, 32], strides = [1, 1]} : vector<256x32xf32> to vector<64x32xf32>
    %6 = arith.maximumf %4, %5 : vector<64x32xf32>
    %7 = vector.extract_strided_slice %3 {offsets = [128, 0], sizes = [64, 32], strides = [1, 1]} : vector<256x32xf32> to vector<64x32xf32>
    %8 = vector.extract_strided_slice %3 {offsets = [192, 0], sizes = [64, 32], strides = [1, 1]} : vector<256x32xf32> to vector<64x32xf32>
    %9 = arith.maximumf %7, %8 : vector<64x32xf32>
    %10 = arith.maximumf %6, %9 : vector<64x32xf32>
    %c0_4 = arith.constant 0 : index
    %c0_5 = arith.constant 0 : index
    %11 = vector.load %arg3[%c0_4, %c0_5] : memref<1x32xf32, #tpu.memory_space<vmem>>, vector<1x32xf32>
    %12 = vector.broadcast %11 : vector<1x32xf32> to vector<64x32xf32>
    %13 = arith.addf %10, %12 : vector<64x32xf32>
    %cst_6 = arith.constant 0.000000e+00 : f32
    %14 = vector.broadcast %cst_6 : f32 to vector<64x32xf32>
    %15 = arith.maximumf %13, %14 : vector<64x32xf32>
    %c0_7 = arith.constant 0 : index
    %c0_8 = arith.constant 0 : index
    %16 = vector.load %arg4[%c0_7, %c0_8] : memref<100x64xf32, #tpu.memory_space<vmem>>, vector<100x64xf32>
    %cst_9 = arith.constant dense<0.000000e+00> : vector<100x32xf32>
    %17 = tpu.matmul %16, %15, %cst_9 {dimension_numbers = #tpu.dot_dimension_numbers<[1], [0], [0], [1], [0, 0, 1, 1], [], []>} : vector<100x64xf32>, vector<64x32xf32>, vector<100x32xf32> -> vector<100x32xf32>
    %cst_10 = arith.constant 0.000000e+00 : f32
    %18 = vector.broadcast %cst_10 : f32 to vector<78x64xf32>
    %19 = vector.extract_strided_slice %17 {offsets = [0, 0], sizes = [78, 32], strides = [1, 1]} : vector<100x32xf32> to vector<78x32xf32>
    %20 = arith.truncf %19 : vector<78x32xf32> to vector<78x32xbf16>
    %c0_11 = arith.constant 0 : index
    %c0_12 = arith.constant 0 : index
    %21 = vector.load %arg5[%c0_11, %c0_12] : memref<288x64xbf16, #tpu.memory_space<vmem>>, vector<32x64xbf16>
    %cst_13 = arith.constant dense<0.000000e+00> : vector<78x64xf32>
    %22 = tpu.matmul %20, %21, %cst_13 {dimension_numbers = #tpu.dot_dimension_numbers<[1], [0], [0], [1], [0, 0, 1, 1], [], []>} : vector<78x32xbf16>, vector<32x64xbf16>, vector<78x64xf32> -> vector<78x64xf32>
    %23 = arith.addf %18, %22 : vector<78x64xf32>
    %24 = vector.extract_strided_slice %17 {offsets = [1, 0], sizes = [78, 32], strides = [1, 1]} : vector<100x32xf32> to vector<78x32xf32>
    %25 = arith.truncf %24 : vector<78x32xf32> to vector<78x32xbf16>
    %c32 = arith.constant 32 : index
    %c0_14 = arith.constant 0 : index
    %26 = vector.load %arg5[%c32, %c0_14] : memref<288x64xbf16, #tpu.memory_space<vmem>>, vector<32x64xbf16>
    %cst_15 = arith.constant dense<0.000000e+00> : vector<78x64xf32>
    %27 = tpu.matmul %25, %26, %cst_15 {dimension_numbers = #tpu.dot_dimension_numbers<[1], [0], [0], [1], [0, 0, 1, 1], [], []>} : vector<78x32xbf16>, vector<32x64xbf16>, vector<78x64xf32> -> vector<78x64xf32>
    %28 = arith.addf %23, %27 : vector<78x64xf32>
    %29 = vector.extract_strided_slice %17 {offsets = [2, 0], sizes = [78, 32], strides = [1, 1]} : vector<100x32xf32> to vector<78x32xf32>
    %30 = arith.truncf %29 : vector<78x32xf32> to vector<78x32xbf16>
    %c64 = arith.constant 64 : index
    %c0_16 = arith.constant 0 : index
    %31 = vector.load %arg5[%c64, %c0_16] : memref<288x64xbf16, #tpu.memory_space<vmem>>, vector<32x64xbf16>
    %cst_17 = arith.constant dense<0.000000e+00> : vector<78x64xf32>
    %32 = tpu.matmul %30, %31, %cst_17 {dimension_numbers = #tpu.dot_dimension_numbers<[1], [0], [0], [1], [0, 0, 1, 1], [], []>} : vector<78x32xbf16>, vector<32x64xbf16>, vector<78x64xf32> -> vector<78x64xf32>
    %33 = arith.addf %28, %32 : vector<78x64xf32>
    %34 = vector.extract_strided_slice %17 {offsets = [10, 0], sizes = [78, 32], strides = [1, 1]} : vector<100x32xf32> to vector<78x32xf32>
    %35 = arith.truncf %34 : vector<78x32xf32> to vector<78x32xbf16>
    %c96 = arith.constant 96 : index
    %c0_18 = arith.constant 0 : index
    %36 = vector.load %arg5[%c96, %c0_18] : memref<288x64xbf16, #tpu.memory_space<vmem>>, vector<32x64xbf16>
    %cst_19 = arith.constant dense<0.000000e+00> : vector<78x64xf32>
    %37 = tpu.matmul %35, %36, %cst_19 {dimension_numbers = #tpu.dot_dimension_numbers<[1], [0], [0], [1], [0, 0, 1, 1], [], []>} : vector<78x32xbf16>, vector<32x64xbf16>, vector<78x64xf32> -> vector<78x64xf32>
    %38 = arith.addf %33, %37 : vector<78x64xf32>
    %39 = vector.extract_strided_slice %17 {offsets = [11, 0], sizes = [78, 32], strides = [1, 1]} : vector<100x32xf32> to vector<78x32xf32>
    %40 = arith.truncf %39 : vector<78x32xf32> to vector<78x32xbf16>
    %c128 = arith.constant 128 : index
    %c0_20 = arith.constant 0 : index
    %41 = vector.load %arg5[%c128, %c0_20] : memref<288x64xbf16, #tpu.memory_space<vmem>>, vector<32x64xbf16>
    %cst_21 = arith.constant dense<0.000000e+00> : vector<78x64xf32>
    %42 = tpu.matmul %40, %41, %cst_21 {dimension_numbers = #tpu.dot_dimension_numbers<[1], [0], [0], [1], [0, 0, 1, 1], [], []>} : vector<78x32xbf16>, vector<32x64xbf16>, vector<78x64xf32> -> vector<78x64xf32>
    %43 = arith.addf %38, %42 : vector<78x64xf32>
    %44 = vector.extract_strided_slice %17 {offsets = [12, 0], sizes = [78, 32], strides = [1, 1]} : vector<100x32xf32> to vector<78x32xf32>
    %45 = arith.truncf %44 : vector<78x32xf32> to vector<78x32xbf16>
    %c160 = arith.constant 160 : index
    %c0_22 = arith.constant 0 : index
    %46 = vector.load %arg5[%c160, %c0_22] : memref<288x64xbf16, #tpu.memory_space<vmem>>, vector<32x64xbf16>
    %cst_23 = arith.constant dense<0.000000e+00> : vector<78x64xf32>
    %47 = tpu.matmul %45, %46, %cst_23 {dimension_numbers = #tpu.dot_dimension_numbers<[1], [0], [0], [1], [0, 0, 1, 1], [], []>} : vector<78x32xbf16>, vector<32x64xbf16>, vector<78x64xf32> -> vector<78x64xf32>
    %48 = arith.addf %43, %47 : vector<78x64xf32>
    %49 = vector.extract_strided_slice %17 {offsets = [20, 0], sizes = [78, 32], strides = [1, 1]} : vector<100x32xf32> to vector<78x32xf32>
    %50 = arith.truncf %49 : vector<78x32xf32> to vector<78x32xbf16>
    %c192 = arith.constant 192 : index
    %c0_24 = arith.constant 0 : index
    %51 = vector.load %arg5[%c192, %c0_24] : memref<288x64xbf16, #tpu.memory_space<vmem>>, vector<32x64xbf16>
    %cst_25 = arith.constant dense<0.000000e+00> : vector<78x64xf32>
    %52 = tpu.matmul %50, %51, %cst_25 {dimension_numbers = #tpu.dot_dimension_numbers<[1], [0], [0], [1], [0, 0, 1, 1], [], []>} : vector<78x32xbf16>, vector<32x64xbf16>, vector<78x64xf32> -> vector<78x64xf32>
    %53 = arith.addf %48, %52 : vector<78x64xf32>
    %54 = vector.extract_strided_slice %17 {offsets = [21, 0], sizes = [78, 32], strides = [1, 1]} : vector<100x32xf32> to vector<78x32xf32>
    %55 = arith.truncf %54 : vector<78x32xf32> to vector<78x32xbf16>
    %c224 = arith.constant 224 : index
    %c0_26 = arith.constant 0 : index
    %56 = vector.load %arg5[%c224, %c0_26] : memref<288x64xbf16, #tpu.memory_space<vmem>>, vector<32x64xbf16>
    %cst_27 = arith.constant dense<0.000000e+00> : vector<78x64xf32>
    %57 = tpu.matmul %55, %56, %cst_27 {dimension_numbers = #tpu.dot_dimension_numbers<[1], [0], [0], [1], [0, 0, 1, 1], [], []>} : vector<78x32xbf16>, vector<32x64xbf16>, vector<78x64xf32> -> vector<78x64xf32>
    %58 = arith.addf %53, %57 : vector<78x64xf32>
    %59 = vector.extract_strided_slice %17 {offsets = [22, 0], sizes = [78, 32], strides = [1, 1]} : vector<100x32xf32> to vector<78x32xf32>
    %60 = arith.truncf %59 : vector<78x32xf32> to vector<78x32xbf16>
    %c256 = arith.constant 256 : index
    %c0_28 = arith.constant 0 : index
    %61 = vector.load %arg5[%c256, %c0_28] : memref<288x64xbf16, #tpu.memory_space<vmem>>, vector<32x64xbf16>
    %cst_29 = arith.constant dense<0.000000e+00> : vector<78x64xf32>
    %62 = tpu.matmul %60, %61, %cst_29 {dimension_numbers = #tpu.dot_dimension_numbers<[1], [0], [0], [1], [0, 0, 1, 1], [], []>} : vector<78x32xbf16>, vector<32x64xbf16>, vector<78x64xf32> -> vector<78x64xf32>
    %63 = arith.addf %58, %62 : vector<78x64xf32>
    %64 = vector.extract_strided_slice %63 {offsets = [0, 0], sizes = [77, 64], strides = [1, 1]} : vector<78x64xf32> to vector<77x64xf32>
    %65 = vector.extract_strided_slice %63 {offsets = [1, 0], sizes = [77, 64], strides = [1, 1]} : vector<78x64xf32> to vector<77x64xf32>
    %66 = arith.maximumf %64, %65 : vector<77x64xf32>
    %67 = vector.extract_strided_slice %66 {offsets = [0, 0], sizes = [67, 64], strides = [1, 1]} : vector<77x64xf32> to vector<67x64xf32>
    %68 = vector.extract_strided_slice %66 {offsets = [10, 0], sizes = [67, 64], strides = [1, 1]} : vector<77x64xf32> to vector<67x64xf32>
    %69 = arith.maximumf %67, %68 : vector<67x64xf32>
    %c0_30 = arith.constant 0 : index
    %c0_31 = arith.constant 0 : index
    %70 = vector.load %arg6[%c0_30, %c0_31] : memref<1x64xf32, #tpu.memory_space<vmem>>, vector<1x64xf32>
    %71 = vector.broadcast %70 : vector<1x64xf32> to vector<67x64xf32>
    %72 = arith.addf %69, %71 : vector<67x64xf32>
    %cst_32 = arith.constant 0.000000e+00 : f32
    %73 = vector.broadcast %cst_32 : f32 to vector<67x64xf32>
    %74 = arith.maximumf %72, %73 : vector<67x64xf32>
    %c0_33 = arith.constant 0 : index
    %c0_34 = arith.constant 0 : index
    %75 = vector.load %arg7[%c0_33, %c0_34] : memref<1x67xf32, #tpu.memory_space<vmem>>, vector<1x67xf32>
    %cst_35 = arith.constant dense<0.000000e+00> : vector<1x64xf32>
    %76 = tpu.matmul %75, %74, %cst_35 {dimension_numbers = #tpu.dot_dimension_numbers<[1], [0], [0], [1], [0, 0, 1, 1], [], []>} : vector<1x67xf32>, vector<67x64xf32>, vector<1x64xf32> -> vector<1x64xf32>
    %c0_36 = arith.constant 0 : index
    %c0_37 = arith.constant 0 : index
    %77 = vector.load %arg8[%c0_36, %c0_37] : memref<64x128xf32, #tpu.memory_space<vmem>>, vector<64x128xf32>
    %cst_38 = arith.constant dense<0.000000e+00> : vector<1x128xf32>
    %78 = tpu.matmul %76, %77, %cst_38 {dimension_numbers = #tpu.dot_dimension_numbers<[1], [0], [0], [1], [0, 0, 1, 1], [], []>} : vector<1x64xf32>, vector<64x128xf32>, vector<1x128xf32> -> vector<1x128xf32>
    %c0_39 = arith.constant 0 : index
    %c0_40 = arith.constant 0 : index
    %79 = vector.load %arg9[%c0_39, %c0_40] : memref<1x128xf32, #tpu.memory_space<vmem>>, vector<1x128xf32>
    %80 = arith.addf %78, %79 : vector<1x128xf32>
    %cst_41 = arith.constant 0.000000e+00 : f32
    %81 = vector.broadcast %cst_41 : f32 to vector<1x128xf32>
    %82 = arith.maximumf %80, %81 : vector<1x128xf32>
    %c0_42 = arith.constant 0 : index
    %c0_43 = arith.constant 0 : index
    %83 = vector.load %arg10[%c0_42, %c0_43] : memref<128x128xf32, #tpu.memory_space<vmem>>, vector<128x128xf32>
    %cst_44 = arith.constant dense<0.000000e+00> : vector<1x128xf32>
    %84 = tpu.matmul %82, %83, %cst_44 {dimension_numbers = #tpu.dot_dimension_numbers<[1], [0], [0], [1], [0, 0, 1, 1], [], []>} : vector<1x128xf32>, vector<128x128xf32>, vector<1x128xf32> -> vector<1x128xf32>
    %c0_45 = arith.constant 0 : index
    %c0_46 = arith.constant 0 : index
    %85 = vector.load %arg11[%c0_45, %c0_46] : memref<1x128xf32, #tpu.memory_space<vmem>>, vector<1x128xf32>
    %86 = arith.addf %84, %85 : vector<1x128xf32>
    %c0_47 = arith.constant 0 : index
    %c0_48 = arith.constant 0 : index
    %c0_49 = arith.constant 0 : index
    %87 = vector.load %arg12[%c0_47, %c0_48, %c0_49] : memref<1x1x128xf32, #tpu.memory_space<vmem>>, vector<1x1x128xf32>
    %88 = vector.shape_cast %87 : vector<1x1x128xf32> to vector<1x128xf32>
    %89 = vector.shape_cast %86 : vector<1x128xf32> to vector<1x1x128xf32>
    tpu.vector_store %arg12[%c0_47, %c0_48, %c0_49], %89 {strides = array<i32>} : memref<1x1x128xf32, #tpu.memory_space<vmem>>, vector<1x1x128xf32>,
    return
  }
  func.func @transform_0(%arg0: i32) -> (i32, i32, i32) {
    %c0_i32 = arith.constant 0 : i32
    %c0_i32_0 = arith.constant 0 : i32
    %c0_i32_1 = arith.constant 0 : i32
    return %arg0, %c0_i32, %c0_i32_0 : i32, i32, i32
  }
  func.func @transform_1(%arg0: i32) -> (i32, i32) {
    %c0_i32 = arith.constant 0 : i32
    %c0_i32_0 = arith.constant 0 : i32
    %c0_i32_1 = arith.constant 0 : i32
    return %c0_i32, %c0_i32_0 : i32, i32
  }
  func.func @transform_2(%arg0: i32) -> (i32, i32) {
    %c0_i32 = arith.constant 0 : i32
    %c0_i32_0 = arith.constant 0 : i32
    %c0_i32_1 = arith.constant 0 : i32
    return %c0_i32, %c0_i32_0 : i32, i32
  }
  func.func @transform_3(%arg0: i32) -> (i32, i32) {
    %c0_i32 = arith.constant 0 : i32
    %c0_i32_0 = arith.constant 0 : i32
    %c0_i32_1 = arith.constant 0 : i32
    return %c0_i32, %c0_i32_0 : i32, i32
  }
  func.func @transform_4(%arg0: i32) -> (i32, i32) {
    %c0_i32 = arith.constant 0 : i32
    %c0_i32_0 = arith.constant 0 : i32
    %c0_i32_1 = arith.constant 0 : i32
    return %c0_i32, %c0_i32_0 : i32, i32
  }
  func.func @transform_5(%arg0: i32) -> (i32, i32) {
    %c0_i32 = arith.constant 0 : i32
    %c0_i32_0 = arith.constant 0 : i32
    %c0_i32_1 = arith.constant 0 : i32
    return %c0_i32, %c0_i32_0 : i32, i32
  }
  func.func @transform_6(%arg0: i32) -> (i32, i32) {
    %c0_i32 = arith.constant 0 : i32
    %c0_i32_0 = arith.constant 0 : i32
    %c0_i32_1 = arith.constant 0 : i32
    return %c0_i32, %c0_i32_0 : i32, i32
  }
  func.func @transform_7(%arg0: i32) -> (i32, i32) {
    %c0_i32 = arith.constant 0 : i32
    %c0_i32_0 = arith.constant 0 : i32
    %c0_i32_1 = arith.constant 0 : i32
    return %c0_i32, %c0_i32_0 : i32, i32
  }
  func.func @transform_8(%arg0: i32) -> (i32, i32) {
    %c0_i32 = arith.constant 0 : i32
    %c0_i32_0 = arith.constant 0 : i32
    %c0_i32_1 = arith.constant 0 : i32
    return %c0_i32, %c0_i32_0 : i32, i32
  }
  func.func @transform_9(%arg0: i32) -> (i32, i32) {
    %c0_i32 = arith.constant 0 : i32
    %c0_i32_0 = arith.constant 0 : i32
    %c0_i32_1 = arith.constant 0 : i32
    return %c0_i32, %c0_i32_0 : i32, i32
  }
  func.func @transform_10(%arg0: i32) -> (i32, i32) {
    %c0_i32 = arith.constant 0 : i32
    %c0_i32_0 = arith.constant 0 : i32
    %c0_i32_1 = arith.constant 0 : i32
    return %c0_i32, %c0_i32_0 : i32, i32
  }
  func.func @transform_11(%arg0: i32) -> (i32, i32, i32) {
    %c0_i32 = arith.constant 0 : i32
    %c0_i32_0 = arith.constant 0 : i32
    %c0_i32_1 = arith.constant 0 : i32
    return %arg0, %c0_i32, %c0_i32_0 : i32, i32, i32
  }
}

</mosaic_0001>

<llo_original>
// kernel: simple_cnn_forward.1
$region0: #{simple_cnn_forward.1}
  #allocation0 [shape = 'u32[]', space=smem, size = 0x4, offset = 0x4, fixed_abs, tag = 'smem constant byte address 0x4 - core index']
  #allocation1 [shape = 'u32[144,128]{1,0:T(1,128)}', space=vmem, size = 0x12000, scoped, tag = 'internal scratch']
  %s0 = inlined_call_operand.vmem [shape: bf16[2,256,27], index: 0, kind: input, shape index: {}]
  %s1 = inlined_call_operand.vmem [shape: bf16[27,32], index: 1, kind: input, shape index: {}]
  %s2 = inlined_call_operand.vmem [shape: f32[1,32], index: 2, kind: input, shape index: {}]
  %s3 = inlined_call_operand.vmem [shape: f32[100,64], index: 3, kind: input, shape index: {}]
  %s4 = inlined_call_operand.vmem [shape: bf16[288,64], index: 4, kind: input, shape index: {}]
  %s5 = inlined_call_operand.vmem [shape: f32[1,64], index: 5, kind: input, shape index: {}]
  %s6 = inlined_call_operand.vmem [shape: f32[1,67], index: 6, kind: input, shape index: {}]
  %s7 = inlined_call_operand.vmem [shape: f32[64,128], index: 7, kind: input, shape index: {}]
  %s8 = inlined_call_operand.vmem [shape: f32[1,128], index: 8, kind: input, shape index: {}]
  %s9 = inlined_call_operand.vmem [shape: f32[128,128], index: 9, kind: input, shape index: {}]
  %s10 = inlined_call_operand.vmem [shape: f32[1,128], index: 10, kind: input, shape index: {}]
  %s11 = inlined_call_operand.hbm [shape: f32[2,1,128], index: 11, kind: output, shape index: {}]
  %s12 = sld [smem:[#allocation0]]
  $region77: #{simple_cnn_forward.1} parent=0
    _
  %s14 = ssub.s32 1, %s12
  %s15 = scalar_select 0, %s14, %s12
  $region1: #{simple_cnn_forward.1} parent=0
    #allocation2 [shape = 'u8[1024]{0}', space=vmem, size = 0x400, scoped, tag = 'output window, operand 0']
    #allocation3 [shape = 's32[2]{0}', space=sflag, size = 0x8, scoped, tag = 'scoped memory for simple_cnn_forward.1']
    %16 = vsyncpa [#allocation3], 0
    %s17 = scalar_lea.sflag [#allocation3], 1
    %18 = vsyncpa %s17, 0
    loop: start=0, step=1, limit=4
    $region2: #{simple_cnn_forward.1} parent=1 // loop_pre_header
      _
    $region3: #{simple_cnn_forward.1} parent=1 // loop_header
      %s20 = sphi 0, %s24
      %p21 = scmp.ge.s32.totalorder %s20, 4
      %s30 = sphi 0, %s32
      %s33 = sphi 0, %s30
      %s34 = sphi 0, %s33
      %s50 = sphi 0, %s34
      %s54 = sphi 0, %s54
      %s56 = sphi 0, %s54
      %s57 = sphi 0, %s56
      %s71 = sphi 0, %s57
      %s75 = sphi 0, %s75
      %s77 = sphi 0, %s75
      %s78 = sphi 0, %s77
      %s92 = sphi 0, %s78
      %s96 = sphi 0, %s96
      %s98 = sphi 0, %s96
      %s99 = sphi 0, %s98
      %s113 = sphi 0, %s99
      %s117 = sphi 0, %s117
      %s119 = sphi 0, %s117
      %s120 = sphi 0, %s119
      %s134 = sphi 0, %s120
      %s138 = sphi 0, %s138
      %s140 = sphi 0, %s138
      %s141 = sphi 0, %s140
      %s155 = sphi 0, %s141
      %s159 = sphi 0, %s159
      %s161 = sphi 0, %s159
      %s162 = sphi 0, %s161
      %s176 = sphi 0, %s162
      %s180 = sphi 0, %s180
      %s182 = sphi 0, %s180
      %s183 = sphi 0, %s182
      %s197 = sphi 0, %s183
      %s201 = sphi 0, %s201
      %s203 = sphi 0, %s201
      %s204 = sphi 0, %s203
      %s218 = sphi 0, %s204
      %s222 = sphi 0, %s222
      %s224 = sphi 0, %s222
      %s225 = sphi 0, %s224
      %s239 = sphi 0, %s225
      %s243 = sphi 0, %s243
      %s245 = sphi 0, %s243
      %s246 = sphi 0, %s245
      %s260 = sphi 0, %s246
      %s266 = sphi 0, %s268
      %s269 = sphi 0, %s266
      %s270 = sphi 0, %s269
      %s286 = sphi 0, %s270
    $region4: #{simple_cnn_forward.1} parent=1 // loop_header_branch
      %23 = sbr.rel (%p21) target = $region8
    $region5: #{simple_cnn_forward.1} parent=1 // loop_body
      %s25 = ssub.s32 %s20, 1
      %s26 = ssub.s32 %s20, 2
      %s27 = sadd.s32 %s20, 1
      %s28 = ssub.s32 %s20, %s27
      %p29 = scmp.eq.s32.totalorder %s28, 0
      %s31 = sadd.s32 %s30, 1
      %s32 = scalar_select %p29, %s30, %s31
      %p35 = pneg %p29
      %p36 = scmp.eq.s32.totalorder %s20, 1
      %p37 = por %p35, %p36
      %p38 = scmp.ne.s32.totalorder %s30, %s33
      %p39 = scmp.eq.s32.totalorder %s20, 0
      %p40 = por %p38, %p39
      %p41 = scmp.ne.s32.totalorder %s30, %s33
      %p42 = scmp.eq.s32.totalorder %s25, 1
      %p43 = por %p41, %p42
      %p44 = scmp.ne.s32.totalorder %s33, %s34
      %p45 = scmp.eq.s32.totalorder %s25, 0
      %p46 = por %p44, %p45
      %p47 = scmp.ne.s32.totalorder %s33, %s34
      %p48 = scmp.eq.s32.totalorder %s26, 1
      %p49 = por %p47, %p48
      %p51 = scmp.ne.s32.totalorder %s34, %s50
      %p52 = scmp.eq.s32.totalorder %s26, 0
      %p53 = por %p51, %p52
      %s55 = sadd.s32 %s54, 1
      %p58 = scmp.eq.s32.totalorder %s20, 1
      %p59 = scmp.ne.s32.totalorder %s54, %s56
      %p60 = scmp.eq.s32.totalorder %s20, 0
      %p61 = por %p59, %p60
      %p62 = scmp.ne.s32.totalorder %s54, %s56
      %p63 = scmp.eq.s32.totalorder %s25, 1
      %p64 = por %p62, %p63
      %p65 = scmp.ne.s32.totalorder %s56, %s57
      %p66 = scmp.eq.s32.totalorder %s25, 0
      %p67 = por %p65, %p66
      %p68 = scmp.ne.s32.totalorder %s56, %s57
      %p69 = scmp.eq.s32.totalorder %s26, 1
      %p70 = por %p68, %p69
      %p72 = scmp.ne.s32.totalorder %s57, %s71
      %p73 = scmp.eq.s32.totalorder %s26, 0
      %p74 = por %p72, %p73
      %s76 = sadd.s32 %s75, 1
      %p79 = scmp.eq.s32.totalorder %s20, 1
      %p80 = scmp.ne.s32.totalorder %s75, %s77
      %p81 = scmp.eq.s32.totalorder %s20, 0
      %p82 = por %p80, %p81
      %p83 = scmp.ne.s32.totalorder %s75, %s77
      %p84 = scmp.eq.s32.totalorder %s25, 1
      %p85 = por %p83, %p84
      %p86 = scmp.ne.s32.totalorder %s77, %s78
      %p87 = scmp.eq.s32.totalorder %s25, 0
      %p88 = por %p86, %p87
      %p89 = scmp.ne.s32.totalorder %s77, %s78
      %p90 = scmp.eq.s32.totalorder %s26, 1
      %p91 = por %p89, %p90
      %p93 = scmp.ne.s32.totalorder %s78, %s92
      %p94 = scmp.eq.s32.totalorder %s26, 0
      %p95 = por %p93, %p94
      %s97 = sadd.s32 %s96, 1
      %p100 = scmp.eq.s32.totalorder %s20, 1
      %p101 = scmp.ne.s32.totalorder %s96, %s98
      %p102 = scmp.eq.s32.totalorder %s20, 0
      %p103 = por %p101, %p102
      %p104 = scmp.ne.s32.totalorder %s96, %s98
      %p105 = scmp.eq.s32.totalorder %s25, 1
      %p106 = por %p104, %p105
      %p107 = scmp.ne.s32.totalorder %s98, %s99
      %p108 = scmp.eq.s32.totalorder %s25, 0
      %p109 = por %p107, %p108
      %p110 = scmp.ne.s32.totalorder %s98, %s99
      %p111 = scmp.eq.s32.totalorder %s26, 1
      %p112 = por %p110, %p111
      %p114 = scmp.ne.s32.totalorder %s99, %s113
      %p115 = scmp.eq.s32.totalorder %s26, 0
      %p116 = por %p114, %p115
      %s118 = sadd.s32 %s117, 1
      %p121 = scmp.eq.s32.totalorder %s20, 1
      %p122 = scmp.ne.s32.totalorder %s117, %s119
      %p123 = scmp.eq.s32.totalorder %s20, 0
      %p124 = por %p122, %p123
      %p125 = scmp.ne.s32.totalorder %s117, %s119
      %p126 = scmp.eq.s32.totalorder %s25, 1
      %p127 = por %p125, %p126
      %p128 = scmp.ne.s32.totalorder %s119, %s120
      %p129 = scmp.eq.s32.totalorder %s25, 0
      %p130 = por %p128, %p129
      %p131 = scmp.ne.s32.totalorder %s119, %s120
      %p132 = scmp.eq.s32.totalorder %s26, 1
      %p133 = por %p131, %p132
      %p135 = scmp.ne.s32.totalorder %s120, %s134
      %p136 = scmp.eq.s32.totalorder %s26, 0
      %p137 = por %p135, %p136
      %s139 = sadd.s32 %s138, 1
      %p142 = scmp.eq.s32.totalorder %s20, 1
      %p143 = scmp.ne.s32.totalorder %s138, %s140
      %p144 = scmp.eq.s32.totalorder %s20, 0
      %p145 = por %p143, %p144
      %p146 = scmp.ne.s32.totalorder %s138, %s140
      %p147 = scmp.eq.s32.totalorder %s25, 1
      %p148 = por %p146, %p147
      %p149 = scmp.ne.s32.totalorder %s140, %s141
      %p150 = scmp.eq.s32.totalorder %s25, 0
      %p151 = por %p149, %p150
      %p152 = scmp.ne.s32.totalorder %s140, %s141
      %p153 = scmp.eq.s32.totalorder %s26, 1
      %p154 = por %p152, %p153
      %p156 = scmp.ne.s32.totalorder %s141, %s155
      %p157 = scmp.eq.s32.totalorder %s26, 0
      %p158 = por %p156, %p157
      %s160 = sadd.s32 %s159, 1
      %p163 = scmp.eq.s32.totalorder %s20, 1
      %p164 = scmp.ne.s32.totalorder %s159, %s161
      %p165 = scmp.eq.s32.totalorder %s20, 0
      %p166 = por %p164, %p165
      %p167 = scmp.ne.s32.totalorder %s159, %s161
      %p168 = scmp.eq.s32.totalorder %s25, 1
      %p169 = por %p167, %p168
      %p170 = scmp.ne.s32.totalorder %s161, %s162
      %p171 = scmp.eq.s32.totalorder %s25, 0
      %p172 = por %p170, %p171
      %p173 = scmp.ne.s32.totalorder %s161, %s162
      %p174 = scmp.eq.s32.totalorder %s26, 1
      %p175 = por %p173, %p174
      %p177 = scmp.ne.s32.totalorder %s162, %s176
      %p178 = scmp.eq.s32.totalorder %s26, 0
      %p179 = por %p177, %p178
      %s181 = sadd.s32 %s180, 1
      %p184 = scmp.eq.s32.totalorder %s20, 1
      %p185 = scmp.ne.s32.totalorder %s180, %s182
      %p186 = scmp.eq.s32.totalorder %s20, 0
      %p187 = por %p185, %p186
      %p188 = scmp.ne.s32.totalorder %s180, %s182
      %p189 = scmp.eq.s32.totalorder %s25, 1
      %p190 = por %p188, %p189
      %p191 = scmp.ne.s32.totalorder %s182, %s183
      %p192 = scmp.eq.s32.totalorder %s25, 0
      %p193 = por %p191, %p192
      %p194 = scmp.ne.s32.totalorder %s182, %s183
      %p195 = scmp.eq.s32.totalorder %s26, 1
      %p196 = por %p194, %p195
      %p198 = scmp.ne.s32.totalorder %s183, %s197
      %p199 = scmp.eq.s32.totalorder %s26, 0
      %p200 = por %p198, %p199
      %s202 = sadd.s32 %s201, 1
      %p205 = scmp.eq.s32.totalorder %s20, 1
      %p206 = scmp.ne.s32.totalorder %s201, %s203
      %p207 = scmp.eq.s32.totalorder %s20, 0
      %p208 = por %p206, %p207
      %p209 = scmp.ne.s32.totalorder %s201, %s203
      %p210 = scmp.eq.s32.totalorder %s25, 1
      %p211 = por %p209, %p210
      %p212 = scmp.ne.s32.totalorder %s203, %s204
      %p213 = scmp.eq.s32.totalorder %s25, 0
      %p214 = por %p212, %p213
      %p215 = scmp.ne.s32.totalorder %s203, %s204
      %p216 = scmp.eq.s32.totalorder %s26, 1
      %p217 = por %p215, %p216
      %p219 = scmp.ne.s32.totalorder %s204, %s218
      %p220 = scmp.eq.s32.totalorder %s26, 0
      %p221 = por %p219, %p220
      %s223 = sadd.s32 %s222, 1
      %p226 = scmp.eq.s32.totalorder %s20, 1
      %p227 = scmp.ne.s32.totalorder %s222, %s224
      %p228 = scmp.eq.s32.totalorder %s20, 0
      %p229 = por %p227, %p228
      %p230 = scmp.ne.s32.totalorder %s222, %s224
      %p231 = scmp.eq.s32.totalorder %s25, 1
      %p232 = por %p230, %p231
      %p233 = scmp.ne.s32.totalorder %s224, %s225
      %p234 = scmp.eq.s32.totalorder %s25, 0
      %p235 = por %p233, %p234
      %p236 = scmp.ne.s32.totalorder %s224, %s225
      %p237 = scmp.eq.s32.totalorder %s26, 1
      %p238 = por %p236, %p237
      %p240 = scmp.ne.s32.totalorder %s225, %s239
      %p241 = scmp.eq.s32.totalorder %s26, 0
      %p242 = por %p240, %p241
      %s244 = sadd.s32 %s243, 1
      %p247 = scmp.eq.s32.totalorder %s20, 1
      %p248 = scmp.ne.s32.totalorder %s243, %s245
      %p249 = scmp.eq.s32.totalorder %s20, 0
      %p250 = por %p248, %p249
      %p251 = scmp.ne.s32.totalorder %s243, %s245
      %p252 = scmp.eq.s32.totalorder %s25, 1
      %p253 = por %p251, %p252
      %p254 = scmp.ne.s32.totalorder %s245, %s246
      %p255 = scmp.eq.s32.totalorder %s25, 0
      %p256 = por %p254, %p255
      %p257 = scmp.ne.s32.totalorder %s245, %s246
      %p258 = scmp.eq.s32.totalorder %s26, 1
      %p259 = por %p257, %p258
      %p261 = scmp.ne.s32.totalorder %s246, %s260
      %p262 = scmp.eq.s32.totalorder %s26, 0
      %p263 = por %p261, %p262
      %s264 = ssub.s32 %s20, %s27
      %p265 = scmp.eq.s32.totalorder %s264, 0
      %s267 = sadd.s32 %s266, 1
      %s268 = scalar_select %p265, %s266, %s267
      %p271 = pneg %p265
      %p272 = scmp.eq.s32.totalorder %s20, 1
      %p273 = por %p271, %p272
      %p274 = scmp.ne.s32.totalorder %s266, %s269
      %p275 = scmp.eq.s32.totalorder %s20, 0
      %p276 = por %p274, %p275
      %p277 = scmp.ne.s32.totalorder %s266, %s269
      %p278 = scmp.eq.s32.totalorder %s25, 1
      %p279 = por %p277, %p278
      %p280 = scmp.ne.s32.totalorder %s269, %s270
      %p281 = scmp.eq.s32.totalorder %s25, 0
      %p282 = por %p280, %p281
      %p283 = scmp.ne.s32.totalorder %s269, %s270
      %p284 = scmp.eq.s32.totalorder %s26, 1
      %p285 = por %p283, %p284
      %p287 = scmp.ne.s32.totalorder %s270, %s286
      %p288 = scmp.eq.s32.totalorder %s26, 0
      %p289 = por %p287, %p288
      %p290 = scmp.le.s32.totalorder 1, %s20
      %p291 = scmp.lt.s32.totalorder %s20, 3
      %p292 = pnand %p290, %p291
      %p293 = pneg %p292
      // Predicated region
      $region9: #{simple_cnn_forward.1} parent=5 // pred_check
        _
      $region10: #{simple_cnn_forward.1} parent=5 // pred_check_branch
        %295 = sbr.rel (%p292) target = $region12
      $region11: #{simple_cnn_forward.1} parent=5 // pred_region
        %s296 = ssub.s32 %s20, 1
        // Predicated region
        $region13: #{simple_cnn_forward.1} parent=11 // pred_check
          %p297 = pneg %p67
        $region14: #{simple_cnn_forward.1} parent=11 // pred_check_branch
          %299 = sbr.rel (%p297) target = $region16
        $region15: #{simple_cnn_forward.1} parent=11 // pred_region
          _
        $region16: #{simple_cnn_forward.1} parent=11 // pred_fallthru
          _
        // Predicated region
        $region17: #{simple_cnn_forward.1} parent=11 // pred_check
          %p300 = pneg %p88
        $region18: #{simple_cnn_forward.1} parent=11 // pred_check_branch
          %302 = sbr.rel (%p300) target = $region20
        $region19: #{simple_cnn_forward.1} parent=11 // pred_region
          _
        $region20: #{simple_cnn_forward.1} parent=11 // pred_fallthru
          _
        // Predicated region
        $region21: #{simple_cnn_forward.1} parent=11 // pred_check
          %p303 = pneg %p109
        $region22: #{simple_cnn_forward.1} parent=11 // pred_check_branch
          %305 = sbr.rel (%p303) target = $region24
        $region23: #{simple_cnn_forward.1} parent=11 // pred_region
          _
        $region24: #{simple_cnn_forward.1} parent=11 // pred_fallthru
          _
        // Predicated region
        $region25: #{simple_cnn_forward.1} parent=11 // pred_check
          %p306 = pneg %p130
        $region26: #{simple_cnn_forward.1} parent=11 // pred_check_branch
          %308 = sbr.rel (%p306) target = $region28
        $region27: #{simple_cnn_forward.1} parent=11 // pred_region
          _
        $region28: #{simple_cnn_forward.1} parent=11 // pred_fallthru
          _
        // Predicated region
        $region29: #{simple_cnn_forward.1} parent=11 // pred_check
          %p309 = pneg %p151
        $region30: #{simple_cnn_forward.1} parent=11 // pred_check_branch
          %311 = sbr.rel (%p309) target = $region32
        $region31: #{simple_cnn_forward.1} parent=11 // pred_region
          _
        $region32: #{simple_cnn_forward.1} parent=11 // pred_fallthru
          _
        // Predicated region
        $region33: #{simple_cnn_forward.1} parent=11 // pred_check
          %p312 = pneg %p172
        $region34: #{simple_cnn_forward.1} parent=11 // pred_check_branch
          %314 = sbr.rel (%p312) target = $region36
        $region35: #{simple_cnn_forward.1} parent=11 // pred_region
          _
        $region36: #{simple_cnn_forward.1} parent=11 // pred_fallthru
          _
        // Predicated region
        $region37: #{simple_cnn_forward.1} parent=11 // pred_check
          %p315 = pneg %p193
        $region38: #{simple_cnn_forward.1} parent=11 // pred_check_branch
          %317 = sbr.rel (%p315) target = $region40
        $region39: #{simple_cnn_forward.1} parent=11 // pred_region
          _
        $region40: #{simple_cnn_forward.1} parent=11 // pred_fallthru
          _
        // Predicated region
        $region41: #{simple_cnn_forward.1} parent=11 // pred_check
          %p318 = pneg %p214
        $region42: #{simple_cnn_forward.1} parent=11 // pred_check_branch
          %320 = sbr.rel (%p318) target = $region44
        $region43: #{simple_cnn_forward.1} parent=11 // pred_region
          _
        $region44: #{simple_cnn_forward.1} parent=11 // pred_fallthru
          _
        // Predicated region
        $region45: #{simple_cnn_forward.1} parent=11 // pred_check
          %p321 = pneg %p235
        $region46: #{simple_cnn_forward.1} parent=11 // pred_check_branch
          %323 = sbr.rel (%p321) target = $region48
        $region47: #{simple_cnn_forward.1} parent=11 // pred_region
          _
        $region48: #{simple_cnn_forward.1} parent=11 // pred_fallthru
          _
        // Predicated region
        $region49: #{simple_cnn_forward.1} parent=11 // pred_check
          %p324 = pneg %p256
        $region50: #{simple_cnn_forward.1} parent=11 // pred_check_branch
          %326 = sbr.rel (%p324) target = $region52
        $region51: #{simple_cnn_forward.1} parent=11 // pred_region
          _
        $region52: #{simple_cnn_forward.1} parent=11 // pred_fallthru
          _
      $region12: #{simple_cnn_forward.1} parent=5 // pred_fallthru
        _
      %p327 = scmp.lt.s32.totalorder %s20, 2
      // Predicated region
      $region53: #{simple_cnn_forward.1} parent=5 // pred_check
        %p328 = pneg %p327
      $region54: #{simple_cnn_forward.1} parent=5 // pred_check_branch
        %330 = sbr.rel (%p328) target = $region56
      $region55: #{simple_cnn_forward.1} parent=5 // pred_region
        // Predicated region
        $region57: #{simple_cnn_forward.1} parent=55 // pred_check
          %p331 = pneg %p40
        $region58: #{simple_cnn_forward.1} parent=55 // pred_check_branch
          %333 = sbr.rel (%p331) target = $region60
        $region59: #{simple_cnn_forward.1} parent=55 // pred_region
          %p334 = scmp.lt.s32.totalorder %s20, 1
          %s335 = scalar_select %p334, %s20, 1
          %s336 = smul.addr %s335, 32
          %s337 = smul.addr %s336, 4
          %s338 = scalar_lea.vmem %s0, %s337
        $region60: #{simple_cnn_forward.1} parent=55 // pred_fallthru
          _
      $region56: #{simple_cnn_forward.1} parent=5 // pred_fallthru
        _
      %p339 = scmp.le.s32.totalorder 1, %s20
      %p340 = scmp.lt.s32.totalorder %s20, 3
      %p341 = pnand %p339, %p340
      %p342 = pneg %p341
      // Predicated region
      $region61: #{simple_cnn_forward.1} parent=5 // pred_check
        _
      $region62: #{simple_cnn_forward.1} parent=5 // pred_check_branch
        %344 = sbr.rel (%p341) target = $region64
      $region63: #{simple_cnn_forward.1} parent=5 // pred_region
        %s345 = ssub.s32 %s20, 1
        %p346 = scmp.lt.s32.totalorder %s25, 1
        %s347 = scalar_select %p346, %s25, 1
        %s348 = smul.addr %s347, 32
        %s349 = smul.addr %s348, 4
        %s350 = scalar_lea.vmem %s0, %s349
        %p351 = pneg %p46
        %p352 = pneg %p43
        %p353 = pneg %p67
        %p354 = pneg %p64
        %p355 = pneg %p88
        %p356 = pneg %p85
        %p357 = pneg %p109
        %p358 = pneg %p106
        %p359 = pneg %p130
        %p360 = pneg %p127
        %p361 = pneg %p151
        %p362 = pneg %p148
        %p363 = pneg %p172
        %p364 = pneg %p169
        %p365 = pneg %p193
        %p366 = pneg %p190
        %p367 = pneg %p214
        %p368 = pneg %p211
        %p369 = pneg %p235
        %p370 = pneg %p232
        %p371 = pneg %p256
        %p372 = pneg %p253
        %p373 = pneg %p282
        %p374 = pneg %p279
        %s375 = sand.u32 %s269, 1
        %s376 = scalar_lea.sflag [#allocation3], %s375
        %s377 = sand.u32 %s269, 1
        %s378 = scalar_lea.vmem [#allocation2], %s377
        %p379 = scmp.lt.s32.totalorder %s25, 1
        %s380 = scalar_select %p379, %s25, 1
        %s381 = smul.addr %s380, 32
        %s382 = smul.addr %s381, 4
        %s383 = scalar_lea.vmem %s0, %s382
        %v385 = vld [vmem:[%s383] sm:$0xf]
        %v386 = vld [vmem:[%s383 + $0x4] sm:$0xf]
        %v387 = vld [vmem:[%s383 + $0x8] sm:$0xf]
        %v388 = vld [vmem:[%s383 + $0xc] sm:$0xf]
        %v389 = vld [vmem:[%s383 + $0x10] sm:$0xf]
        %v390 = vld [vmem:[%s383 + $0x14] sm:$0xf]
        %v391 = vld [vmem:[%s383 + $0x18] sm:$0xf]
        %v392 = vld [vmem:[%s383 + $0x1c] sm:$0xf]
        %v393 = vld [vmem:[%s383 + $0x20] sm:$0xf]
        %v394 = vld [vmem:[%s383 + $0x24] sm:$0xf]
        %v395 = vld [vmem:[%s383 + $0x28] sm:$0xf]
        %v396 = vld [vmem:[%s383 + $0x2c] sm:$0xf]
        %v397 = vld [vmem:[%s383 + $0x30] sm:$0xf]
        %v398 = vld [vmem:[%s383 + $0x34] sm:$0xf]
        %v399 = vld [vmem:[%s383 + $0x38] sm:$0xf]
        %v400 = vld [vmem:[%s383 + $0x3c] sm:$0xf]
        %v401 = vld [vmem:[%s383 + $0x40] sm:$0xf]
        %v402 = vld [vmem:[%s383 + $0x44] sm:$0xf]
        %v403 = vld [vmem:[%s383 + $0x48] sm:$0xf]
        %v404 = vld [vmem:[%s383 + $0x4c] sm:$0xf]
        %v405 = vld [vmem:[%s383 + $0x50] sm:$0xf]
        %v406 = vld [vmem:[%s383 + $0x54] sm:$0xf]
        %v407 = vld [vmem:[%s383 + $0x58] sm:$0xf]
        %v408 = vld [vmem:[%s383 + $0x5c] sm:$0xf]
        %v409 = vld [vmem:[%s383 + $0x60] sm:$0xf]
        %v410 = vld [vmem:[%s383 + $0x64] sm:$0xf]
        %v411 = vld [vmem:[%s383 + $0x68] sm:$0xf]
        %v412 = vld [vmem:[%s383 + $0x6c] sm:$0xf]
        %v413 = vld [vmem:[%s383 + $0x70] sm:$0xf]
        %v414 = vld [vmem:[%s383 + $0x74] sm:$0xf]
        %v415 = vld [vmem:[%s383 + $0x78] sm:$0xf]
        %v416 = vld [vmem:[%s383 + $0x7c] sm:$0xf]
        %v417 = vld [vmem:[%s1] sm:$0xf]
        %v418 = vld [vmem:[%s1 + $0x4] sm:$0xf]
        %v419 = vld [vmem:[%s1 + $0x8] sm:$0xf]
        %v420 = vld [vmem:[%s1 + $0xc] sm:$0x3]
        %v453 = vunpack.c.l.b16 %v385
        %v454 = vunpack.c.l.b16 %v386
        %v455 = vunpack.c.l.b16 %v387
        %v456 = vunpack.c.l.b16 %v388
        %v457 = vunpack.c.l.b16 %v389
        %v458 = vunpack.c.l.b16 %v390
        %v459 = vunpack.c.l.b16 %v391
        %v460 = vunpack.c.l.b16 %v392
        %v461 = vunpack.c.l.b16 %v393
        %v462 = vunpack.c.l.b16 %v394
        %v463 = vunpack.c.l.b16 %v395
        %v464 = vunpack.c.l.b16 %v396
        %v465 = vunpack.c.l.b16 %v397
        %v466 = vunpack.c.l.b16 %v398
        %v467 = vunpack.c.l.b16 %v399
        %v468 = vunpack.c.l.b16 %v400
        %v469 = vunpack.c.l.b16 %v401
        %v470 = vunpack.c.l.b16 %v402
        %v471 = vunpack.c.l.b16 %v403
        %v472 = vunpack.c.l.b16 %v404
        %v473 = vunpack.c.l.b16 %v405
        %v474 = vunpack.c.l.b16 %v406
        %v475 = vunpack.c.l.b16 %v407
        %v476 = vunpack.c.l.b16 %v408
        %v477 = vunpack.c.l.b16 %v409
        %v478 = vunpack.c.l.b16 %v410
        %v479 = vunpack.c.l.b16 %v411
        %v480 = vunpack.c.l.b16 %v412
        %v481 = vunpack.c.l.b16 %v413
        %v482 = vunpack.c.l.b16 %v414
        %v483 = vunpack.c.l.b16 %v415
        %v484 = vunpack.c.l.b16 %v416
        %v485 = vpack.c.b16 %v454, %v453
        %v486 = vpack.c.b16 %v456, %v455
        %v487 = vpack.c.b16 %v458, %v457
        %v488 = vpack.c.b16 %v460, %v459
        %v489 = vpack.c.b16 %v462, %v461
        %v490 = vpack.c.b16 %v464, %v463
        %v491 = vpack.c.b16 %v466, %v465
        %v492 = vpack.c.b16 %v468, %v467
        %v493 = vpack.c.b16 %v470, %v469
        %v494 = vpack.c.b16 %v472, %v471
        %v495 = vpack.c.b16 %v474, %v473
        %v496 = vpack.c.b16 %v476, %v475
        %v497 = vpack.c.b16 %v478, %v477
        %v498 = vpack.c.b16 %v480, %v479
        %v499 = vpack.c.b16 %v482, %v481
        %v500 = vpack.c.b16 %v484, %v483
        %v505 = vunpack.c.l.b16 %v417
        %v506 = vunpack.c.l.b16 %v418
        %v507 = vunpack.c.l.b16 %v419
        %v508 = vunpack.c.l.b16 %v420
        %v509 = vpack.c.b16 %v506, %v505
        %v510 = vpack.c.b16 %v508, %v507
        %vm512 = vcmask 220160
        %v514 = vsel %vm512, %v485, 0
        %v517 = vsel %vm512, %v486, 0
        %v520 = vsel %vm512, %v487, 0
        %v523 = vsel %vm512, %v488, 0
        %v526 = vsel %vm512, %v489, 0
        %v529 = vsel %vm512, %v490, 0
        %v532 = vsel %vm512, %v491, 0
        %v535 = vsel %vm512, %v492, 0
        %v538 = vsel %vm512, %v493, 0
        %v541 = vsel %vm512, %v494, 0
        %v544 = vsel %vm512, %v495, 0
        %v547 = vsel %vm512, %v496, 0
        %v550 = vsel %vm512, %v497, 0
        %v553 = vsel %vm512, %v498, 0
        %v556 = vsel %vm512, %v499, 0
        %v559 = vsel %vm512, %v500, 0
        %vm561 = vcmask 1044480
        %vm562 = vcmask 1045504
        %v563 = vsel %vm561, 4294967295, 65535
        %v564 = vsel %vm562, %v563, 0
        %v566 = vand.u32 %v510, %v564
        %568 = vmatprep.subr.bf16.mxu0 0
        %569 = vmatpush1.bf16.msra.mxu0 0
        %570 = vmatprep.subr.bf16.mxu0 0
        %571 = vmatpush1.bf16.msra.mxu0 0
        %572 = vmatprep.subr.bf16.mxu0 0
        %573 = vmatpush1.bf16.msra.mxu0 0
        %574 = vmatprep.subr.bf16.mxu0 0
        %575 = vmatpush1.bf16.msra.mxu0 0
        %576 = vmatprep.subr.bf16.mxu0 0
        %577 = vmatpush1.bf16.msra.mxu0 0
        %578 = vmatprep.subr.bf16.mxu0 0
        %579 = vmatpush1.bf16.msra.mxu0 0
        %580 = vmatprep.subr.bf16.mxu0 0
        %581 = vmatpush1.bf16.msra.mxu0 %v566
        %582 = vmatprep.subr.bf16.mxu0 0
        %583 = vmatpush1.bf16.msra.mxu0 %v509
        %584 = vmatprep.subr.bf16.mxu0 0
        %585 = vmatpush2.bf16.msra.mxu0 0
        %586 = vmatprep.subr.bf16.mxu0 0
        %587 = vmatpush2.bf16.msra.mxu0 0
        %588 = vmatprep.subr.bf16.mxu0 0
        %589 = vmatpush2.bf16.msra.mxu0 0
        %590 = vmatprep.subr.bf16.mxu0 0
        %591 = vmatpush2.bf16.msra.mxu0 0
        %592 = vmatprep.subr.bf16.mxu0 0
        %593 = vmatpush2.bf16.msra.mxu0 0
        %594 = vmatprep.subr.bf16.mxu0 0
        %595 = vmatpush2.bf16.msra.mxu0 0
        %596 = vmatprep.subr.bf16.mxu0 0
        %597 = vmatpush2.bf16.msra.mxu0 0
        %598 = vmatprep.subr.bf16.mxu0 0
        %599 = vmatpush2.bf16.msra.mxu0 0
        %600 = vmatprep.mubr.bf16.mxu0 0
        %601 = vmatmul.mubr.bf16.gmra.mxu0 %v514
        %v602 = vpop.f32.mrf.mxu0
        %v603 = vadd.f32 0.0, %v602
        %v604 = vpop.f32.mrf.mxu0
        %v605 = vpop.f32.mrf.mxu0
        %v606 = vadd.f32 0.0, %v605
        %v607 = vpop.f32.mrf.mxu0
        %608 = vmatprep.mubr.bf16.mxu0 0
        %609 = vmatmul.mubr.bf16.gmra.mxu0 %v517
        %v610 = vpop.f32.mrf.mxu0
        %v611 = vadd.f32 0.0, %v610
        %v612 = vpop.f32.mrf.mxu0
        %v613 = vpop.f32.mrf.mxu0
        %v614 = vadd.f32 0.0, %v613
        %v615 = vpop.f32.mrf.mxu0
        %616 = vmatprep.mubr.bf16.mxu0 0
        %617 = vmatmul.mubr.bf16.gmra.mxu0 %v520
        %v618 = vpop.f32.mrf.mxu0
        %v619 = vadd.f32 0.0, %v618
        %v620 = vpop.f32.mrf.mxu0
        %v621 = vpop.f32.mrf.mxu0
        %v622 = vadd.f32 0.0, %v621
        %v623 = vpop.f32.mrf.mxu0
        %624 = vmatprep.mubr.bf16.mxu0 0
        %625 = vmatmul.mubr.bf16.gmra.mxu0 %v523
        %v626 = vpop.f32.mrf.mxu0
        %v627 = vadd.f32 0.0, %v626
        %v628 = vpop.f32.mrf.mxu0
        %v629 = vpop.f32.mrf.mxu0
        %v630 = vadd.f32 0.0, %v629
        %v631 = vpop.f32.mrf.mxu0
        %632 = vmatprep.mubr.bf16.mxu0 0
        %633 = vmatmul.mubr.bf16.gmra.mxu0 %v526
        %v634 = vpop.f32.mrf.mxu0
        %v635 = vadd.f32 0.0, %v634
        %v636 = vpop.f32.mrf.mxu0
        %v637 = vpop.f32.mrf.mxu0
        %v638 = vadd.f32 0.0, %v637
        %v639 = vpop.f32.mrf.mxu0
        %640 = vmatprep.mubr.bf16.mxu0 0
        %641 = vmatmul.mubr.bf16.gmra.mxu0 %v529
        %v642 = vpop.f32.mrf.mxu0
        %v643 = vadd.f32 0.0, %v642
        %v644 = vpop.f32.mrf.mxu0
        %v645 = vpop.f32.mrf.mxu0
        %v646 = vadd.f32 0.0, %v645
        %v647 = vpop.f32.mrf.mxu0
        %648 = vmatprep.mubr.bf16.mxu0 0
        %649 = vmatmul.mubr.bf16.gmra.mxu0 %v532
        %v650 = vpop.f32.mrf.mxu0
        %v651 = vadd.f32 0.0, %v650
        %v652 = vpop.f32.mrf.mxu0
        %v653 = vpop.f32.mrf.mxu0
        %v654 = vadd.f32 0.0, %v653
        %v655 = vpop.f32.mrf.mxu0
        %656 = vmatprep.mubr.bf16.mxu0 0
        %657 = vmatmul.mubr.bf16.gmra.mxu0 %v535
        %v658 = vpop.f32.mrf.mxu0
        %v659 = vadd.f32 0.0, %v658
        %v660 = vpop.f32.mrf.mxu0
        %v661 = vpop.f32.mrf.mxu0
        %v662 = vadd.f32 0.0, %v661
        %v663 = vpop.f32.mrf.mxu0
        %664 = vmatprep.mubr.bf16.mxu0 0
        %665 = vmatmul.mubr.bf16.gmra.mxu0 %v538
        %v666 = vpop.f32.mrf.mxu0
        %v667 = vadd.f32 0.0, %v666
        %v668 = vpop.f32.mrf.mxu0
        %v669 = vpop.f32.mrf.mxu0
        %v670 = vadd.f32 0.0, %v669
        %v671 = vpop.f32.mrf.mxu0
        %672 = vmatprep.mubr.bf16.mxu0 0
        %673 = vmatmul.mubr.bf16.gmra.mxu0 %v541
        %v674 = vpop.f32.mrf.mxu0
        %v675 = vadd.f32 0.0, %v674
        %v676 = vpop.f32.mrf.mxu0
        %v677 = vpop.f32.mrf.mxu0
        %v678 = vadd.f32 0.0, %v677
        %v679 = vpop.f32.mrf.mxu0
        %680 = vmatprep.mubr.bf16.mxu0 0
        %681 = vmatmul.mubr.bf16.gmra.mxu0 %v544
        %v682 = vpop.f32.mrf.mxu0
        %v683 = vadd.f32 0.0, %v682
        %v684 = vpop.f32.mrf.mxu0
        %v685 = vpop.f32.mrf.mxu0
        %v686 = vadd.f32 0.0, %v685
        %v687 = vpop.f32.mrf.mxu0
        %688 = vmatprep.mubr.bf16.mxu0 0
        %689 = vmatmul.mubr.bf16.gmra.mxu0 %v547
        %v690 = vpop.f32.mrf.mxu0
        %v691 = vadd.f32 0.0, %v690
        %v692 = vpop.f32.mrf.mxu0
        %v693 = vpop.f32.mrf.mxu0
        %v694 = vadd.f32 0.0, %v693
        %v695 = vpop.f32.mrf.mxu0
        %696 = vmatprep.mubr.bf16.mxu0 0
        %697 = vmatmul.mubr.bf16.gmra.mxu0 %v550
        %v698 = vpop.f32.mrf.mxu0
        %v699 = vadd.f32 0.0, %v698
        %v700 = vpop.f32.mrf.mxu0
        %v701 = vpop.f32.mrf.mxu0
        %v702 = vadd.f32 0.0, %v701
        %v703 = vpop.f32.mrf.mxu0
        %704 = vmatprep.mubr.bf16.mxu0 0
        %705 = vmatmul.mubr.bf16.gmra.mxu0 %v553
        %v706 = vpop.f32.mrf.mxu0
        %v707 = vadd.f32 0.0, %v706
        %v708 = vpop.f32.mrf.mxu0
        %v709 = vpop.f32.mrf.mxu0
        %v710 = vadd.f32 0.0, %v709
        %v711 = vpop.f32.mrf.mxu0
        %712 = vmatprep.mubr.bf16.mxu0 0
        %713 = vmatmul.mubr.bf16.gmra.mxu0 %v556
        %v714 = vpop.f32.mrf.mxu0
        %v715 = vadd.f32 0.0, %v714
        %v716 = vpop.f32.mrf.mxu0
        %v717 = vpop.f32.mrf.mxu0
        %v718 = vadd.f32 0.0, %v717
        %v719 = vpop.f32.mrf.mxu0
        %720 = vmatprep.mubr.bf16.mxu0 0
        %721 = vmatmul.mubr.bf16.gmra.mxu0 %v559
        %v722 = vpop.f32.mrf.mxu0
        %v723 = vadd.f32 0.0, %v722
        %v724 = vpop.f32.mrf.mxu0
        %v725 = vpop.f32.mrf.mxu0
        %v726 = vadd.f32 0.0, %v725
        %v727 = vpop.f32.mrf.mxu0
        %728 = vdwg.mxu0
        %v729 = vmax.f32 %v603, %v635
        %v730 = vmax.f32 %v606, %v638
        %v731 = vmax.f32 %v611, %v643
        %v732 = vmax.f32 %v614, %v646
        %v733 = vmax.f32 %v619, %v651
        %v734 = vmax.f32 %v622, %v654
        %v735 = vmax.f32 %v627, %v659
        %v736 = vmax.f32 %v630, %v662
        %v737 = vmax.f32 %v667, %v699
        %v738 = vmax.f32 %v670, %v702
        %v739 = vmax.f32 %v675, %v707
        %v740 = vmax.f32 %v678, %v710
        %v741 = vmax.f32 %v683, %v715
        %v742 = vmax.f32 %v686, %v718
        %v743 = vmax.f32 %v691, %v723
        %v744 = vmax.f32 %v694, %v726
        %v745 = vmax.f32 %v729, %v737
        %v746 = vmax.f32 %v730, %v738
        %v747 = vmax.f32 %v731, %v739
        %v748 = vmax.f32 %v732, %v740
        %v749 = vmax.f32 %v733, %v741
        %v750 = vmax.f32 %v734, %v742
        %v751 = vmax.f32 %v735, %v743
        %v752 = vmax.f32 %v736, %v744
        %v753 = vld [vmem:[%s2] sm:$0x1]
        %v755 = vlaneseq
        %v756 = vshrl.u32 %v755, 7
        %v757 = vsub.s32 0, %v756
        %v758 = vrot.slane %v753, %v757
        %v760 = vadd.f32 %v745, %v758
        %v761 = vadd.f32 %v746, %v758
        %v762 = vadd.f32 %v747, %v758
        %v763 = vadd.f32 %v748, %v758
        %v764 = vadd.f32 %v749, %v758
        %v765 = vadd.f32 %v750, %v758
        %v766 = vadd.f32 %v751, %v758
        %v767 = vadd.f32 %v752, %v758
        %v768 = vmax.f32 %v760, 0.0
        %v769 = vmax.f32 %v761, 0.0
        %v770 = vmax.f32 %v762, 0.0
        %v771 = vmax.f32 %v763, 0.0
        %v772 = vmax.f32 %v764, 0.0
        %v773 = vmax.f32 %v765, 0.0
        %v774 = vmax.f32 %v766, 0.0
        %v775 = vmax.f32 %v767, 0.0
        %v776 = vld [vmem:[%s3] sm:$0xff]
        %v777 = vld [vmem:[%s3 + $0x8] sm:$0xff]
        %v778 = vld [vmem:[%s3 + $0x10] sm:$0xff]
        %v779 = vld [vmem:[%s3 + $0x18] sm:$0xff]
        %v780 = vld [vmem:[%s3 + $0x20] sm:$0xff]
        %v781 = vld [vmem:[%s3 + $0x28] sm:$0xff]
        %v782 = vld [vmem:[%s3 + $0x30] sm:$0xff]
        %v783 = vld [vmem:[%s3 + $0x38] sm:$0xff]
        %v784 = vld [vmem:[%s3 + $0x40] sm:$0xff]
        %v785 = vld [vmem:[%s3 + $0x48] sm:$0xff]
        %v786 = vld [vmem:[%s3 + $0x50] sm:$0xff]
        %v787 = vld [vmem:[%s3 + $0x58] sm:$0xff]
        %v788 = vld [vmem:[%s3 + $0x60] sm:$0xf]
        %vm789 = vcmask 523264
        %v791 = vsel %vm789, %v776, 0
        %v794 = vsel %vm789, %v777, 0
        %v797 = vsel %vm789, %v778, 0
        %v800 = vsel %vm789, %v779, 0
        %v803 = vsel %vm789, %v780, 0
        %v806 = vsel %vm789, %v781, 0
        %v809 = vsel %vm789, %v782, 0
        %v812 = vsel %vm789, %v783, 0
        %v815 = vsel %vm789, %v784, 0
        %v818 = vsel %vm789, %v785, 0
        %v821 = vsel %vm789, %v786, 0
        %v824 = vsel %vm789, %v787, 0
        %v827 = vsel %vm789, %v788, 0
        %829 = vmatprep.subr.mxu0 0.0
        %830 = vmatpush1.msra.mxu0 0.0
        %831 = vmatprep.subr.mxu0 0.0
        %832 = vmatpush1.msra.mxu0 0.0
        %833 = vmatprep.subr.mxu0 0.0
        %834 = vmatpush1.msra.mxu0 0.0
        %835 = vmatprep.subr.mxu0 0.0
        %836 = vmatpush1.msra.mxu0 0.0
        %837 = vmatprep.subr.mxu0 0.0
        %838 = vmatpush1.msra.mxu0 0.0
        %839 = vmatprep.subr.mxu0 0.0
        %840 = vmatpush1.msra.mxu0 0.0
        %841 = vmatprep.subr.mxu0 0.0
        %842 = vmatpush1.msra.mxu0 0.0
        %843 = vmatprep.subr.mxu0 0.0
        %844 = vmatpush1.msra.mxu0 0.0
        %845 = vmatprep.subr.mxu0 0.0
        %846 = vmatpush1.msra.mxu0 %v775
        %847 = vmatprep.subr.mxu0 0.0
        %848 = vmatpush1.msra.mxu0 %v774
        %849 = vmatprep.subr.mxu0 0.0
        %850 = vmatpush1.msra.mxu0 %v773
        %851 = vmatprep.subr.mxu0 0.0
        %852 = vmatpush1.msra.mxu0 %v772
        %853 = vmatprep.subr.mxu0 0.0
        %854 = vmatpush1.msra.mxu0 %v771
        %855 = vmatprep.subr.mxu0 0.0
        %856 = vmatpush1.msra.mxu0 %v770
        %857 = vmatprep.subr.mxu0 0.0
        %858 = vmatpush1.msra.mxu0 %v769
        %859 = vmatprep.subr.mxu0 0.0
        %860 = vmatpush1.msra.mxu0 %v768
        %861 = vmatprep.subr.mxu0 0.0
        %862 = vmatpush2.msra.mxu0 0.0
        %863 = vmatprep.subr.mxu0 0.0
        %864 = vmatpush2.msra.mxu0 0.0
        %865 = vmatprep.subr.mxu0 0.0
        %866 = vmatpush2.msra.mxu0 0.0
        %867 = vmatprep.subr.mxu0 0.0
        %868 = vmatpush2.msra.mxu0 0.0
        %869 = vmatprep.subr.mxu0 0.0
        %870 = vmatpush2.msra.mxu0 0.0
        %871 = vmatprep.subr.mxu0 0.0
        %872 = vmatpush2.msra.mxu0 0.0
        %873 = vmatprep.subr.mxu0 0.0
        %874 = vmatpush2.msra.mxu0 0.0
        %875 = vmatprep.subr.mxu0 0.0
        %876 = vmatpush2.msra.mxu0 0.0
        %877 = vmatprep.subr.mxu0 0.0
        %878 = vmatpush2.msra.mxu0 0.0
        %879 = vmatprep.subr.mxu0 0.0
        %880 = vmatpush2.msra.mxu0 0.0
        %881 = vmatprep.subr.mxu0 0.0
        %882 = vmatpush2.msra.mxu0 0.0
        %883 = vmatprep.subr.mxu0 0.0
        %884 = vmatpush2.msra.mxu0 0.0
        %885 = vmatprep.subr.mxu0 0.0
        %886 = vmatpush2.msra.mxu0 0.0
        %887 = vmatprep.subr.mxu0 0.0
        %888 = vmatpush2.msra.mxu0 0.0
        %889 = vmatprep.subr.mxu0 0.0
        %890 = vmatpush2.msra.mxu0 0.0
        %891 = vmatprep.subr.mxu0 0.0
        %892 = vmatpush2.msra.mxu0 0.0
        %893 = vmatprep.mubr.f32.mxu0 0.0
        %894 = vmatmul.mubr.f32.gmra.mxu0 %v791
        %v895 = vpop.f32.mrf.mxu0
        %v896 = vadd.f32 0.0, %v895
        %v897 = vpop.f32.mrf.mxu0
        %898 = vmatprep.mubr.f32.mxu0 0.0
        %899 = vmatmul.mubr.f32.gmra.mxu0 %v794
        %v900 = vpop.f32.mrf.mxu0
        %v901 = vadd.f32 0.0, %v900
        %v902 = vpop.f32.mrf.mxu0
        %903 = vmatprep.mubr.f32.mxu0 0.0
        %904 = vmatmul.mubr.f32.gmra.mxu0 %v797
        %v905 = vpop.f32.mrf.mxu0
        %v906 = vadd.f32 0.0, %v905
        %v907 = vpop.f32.mrf.mxu0
        %908 = vmatprep.mubr.f32.mxu0 0.0
        %909 = vmatmul.mubr.f32.gmra.mxu0 %v800
        %v910 = vpop.f32.mrf.mxu0
        %v911 = vadd.f32 0.0, %v910
        %v912 = vpop.f32.mrf.mxu0
        %913 = vmatprep.mubr.f32.mxu0 0.0
        %914 = vmatmul.mubr.f32.gmra.mxu0 %v803
        %v915 = vpop.f32.mrf.mxu0
        %v916 = vadd.f32 0.0, %v915
        %v917 = vpop.f32.mrf.mxu0
        %918 = vmatprep.mubr.f32.mxu0 0.0
        %919 = vmatmul.mubr.f32.gmra.mxu0 %v806
        %v920 = vpop.f32.mrf.mxu0
        %v921 = vadd.f32 0.0, %v920
        %v922 = vpop.f32.mrf.mxu0
        %923 = vmatprep.mubr.f32.mxu0 0.0
        %924 = vmatmul.mubr.f32.gmra.mxu0 %v809
        %v925 = vpop.f32.mrf.mxu0
        %v926 = vadd.f32 0.0, %v925
        %v927 = vpop.f32.mrf.mxu0
        %928 = vmatprep.mubr.f32.mxu0 0.0
        %929 = vmatmul.mubr.f32.gmra.mxu0 %v812
        %v930 = vpop.f32.mrf.mxu0
        %v931 = vadd.f32 0.0, %v930
        %v932 = vpop.f32.mrf.mxu0
        %933 = vmatprep.mubr.f32.mxu0 0.0
        %934 = vmatmul.mubr.f32.gmra.mxu0 %v815
        %v935 = vpop.f32.mrf.mxu0
        %v936 = vadd.f32 0.0, %v935
        %v937 = vpop.f32.mrf.mxu0
        %938 = vmatprep.mubr.f32.mxu0 0.0
        %939 = vmatmul.mubr.f32.gmra.mxu0 %v818
        %v940 = vpop.f32.mrf.mxu0
        %v941 = vadd.f32 0.0, %v940
        %v942 = vpop.f32.mrf.mxu0
        %943 = vmatprep.mubr.f32.mxu0 0.0
        %944 = vmatmul.mubr.f32.gmra.mxu0 %v821
        %v945 = vpop.f32.mrf.mxu0
        %v946 = vadd.f32 0.0, %v945
        %v947 = vpop.f32.mrf.mxu0
        %948 = vmatprep.mubr.f32.mxu0 0.0
        %949 = vmatmul.mubr.f32.gmra.mxu0 %v824
        %v950 = vpop.f32.mrf.mxu0
        %v951 = vadd.f32 0.0, %v950
        %v952 = vpop.f32.mrf.mxu0
        %953 = vmatprep.mubr.f32.mxu0 0.0
        %954 = vmatmul.mubr.f32.gmra.mxu0 %v827
        %v955 = vpop.f32.mrf.mxu0
        %v956 = vadd.f32 0.0, %v955
        %v957 = vpop.f32.mrf.mxu0
        %958 = vdwg.mxu0
        %v959 = vpack.c.bf16 %v901, %v896
        %v960 = vpack.c.bf16 %v911, %v906
        %v961 = vpack.c.bf16 %v921, %v916
        %v962 = vpack.c.bf16 %v931, %v926
        %v963 = vpack.c.bf16 %v941, %v936
        %v964 = vld [vmem:[%s4] sm:$0xf]
        %v965 = vld [vmem:[%s4 + $0x4] sm:$0xf]
        %v966 = vld [vmem:[%s4 + $0x8] sm:$0xf]
        %v967 = vld [vmem:[%s4 + $0xc] sm:$0xf]
        %v968 = vld [vmem:[%s4 + $0x10] sm:$0xf]
        %v969 = vld [vmem:[%s4 + $0x14] sm:$0xf]
        %v970 = vld [vmem:[%s4 + $0x18] sm:$0xf]
        %v971 = vld [vmem:[%s4 + $0x1c] sm:$0xf]
        %vm972 = vsmask.f32 7424
        %v974 = vshrl.u32 %v959, 16
        %v976 = vshll.u32 %v959, 16
        %v978 = vrot.slane %v976, 1
        %v979 = vor.u32 %v974, %v978
        %v981 = vshll.u32 %v960, 16
        %v983 = vrot.slane %v981, 1
        %v984 = vsel %vm972, %v979, %v983
        %v985 = vshrl.u32 %v960, 16
        %v987 = vor.u32 %v985, %v983
        %v989 = vshll.u32 %v961, 16
        %v991 = vrot.slane %v989, 1
        %v992 = vsel %vm972, %v987, %v991
        %v993 = vshrl.u32 %v961, 16
        %v995 = vor.u32 %v993, %v991
        %v997 = vshll.u32 %v962, 16
        %v999 = vrot.slane %v997, 1
        %v1000 = vsel %vm972, %v995, %v999
        %v1001 = vshrl.u32 %v962, 16
        %v1003 = vor.u32 %v1001, %v999
        %v1005 = vshll.u32 %v963, 16
        %v1007 = vrot.slane %v1005, 1
        %v1008 = vsel %vm972, %v1003, %v1007
        %v1009 = vshrl.u32 %v963, 16
        %v1011 = vor.u32 %v1009, %v1007
        %v1016 = vunpack.c.l.b16 %v968
        %v1017 = vunpack.c.l.b16 %v969
        %v1018 = vunpack.c.l.b16 %v970
        %v1019 = vunpack.c.l.b16 %v971
        %v1020 = vpack.c.b16 %v1017, %v1016
        %v1021 = vpack.c.b16 %v1019, %v1018
        %vm1024 = vcmask 261120
        %v1026 = vsel %vm1024, %v984, 0
        %v1029 = vsel %vm1024, %v992, 0
        %v1032 = vsel %vm1024, %v1000, 0
        %v1035 = vsel %vm1024, %v1008, 0
        %v1038 = vsel %vm1024, %v1011, 0
        %1040 = vmatprep.subr.bf16.mxu0 0
        %1041 = vmatpush1.bf16.msra.mxu0 0
        %1042 = vmatprep.subr.bf16.mxu0 0
        %1043 = vmatpush1.bf16.msra.mxu0 0
        %1044 = vmatprep.subr.bf16.mxu0 0
        %1045 = vmatpush1.bf16.msra.mxu0 0
        %1046 = vmatprep.subr.bf16.mxu0 0
        %1047 = vmatpush1.bf16.msra.mxu0 0
        %1048 = vmatprep.subr.bf16.mxu0 0
        %1049 = vmatpush1.bf16.msra.mxu0 0
        %1050 = vmatprep.subr.bf16.mxu0 0
        %1051 = vmatpush1.bf16.msra.mxu0 0
        %1052 = vmatprep.subr.bf16.mxu0 0
        %1053 = vmatpush1.bf16.msra.mxu0 %v1021
        %1054 = vmatprep.subr.bf16.mxu0 0
        %1055 = vmatpush1.bf16.msra.mxu0 %v1020
        %1056 = vmatprep.subr.bf16.mxu0 0
        %1057 = vmatpush2.bf16.msra.mxu0 0
        %1058 = vmatprep.subr.bf16.mxu0 0
        %1059 = vmatpush2.bf16.msra.mxu0 0
        %1060 = vmatprep.subr.bf16.mxu0 0
        %1061 = vmatpush2.bf16.msra.mxu0 0
        %1062 = vmatprep.subr.bf16.mxu0 0
        %1063 = vmatpush2.bf16.msra.mxu0 0
        %1064 = vmatprep.subr.bf16.mxu0 0
        %1065 = vmatpush2.bf16.msra.mxu0 0
        %1066 = vmatprep.subr.bf16.mxu0 0
        %1067 = vmatpush2.bf16.msra.mxu0 0
        %1068 = vmatprep.subr.bf16.mxu0 0
        %1069 = vmatpush2.bf16.msra.mxu0 0
        %1070 = vmatprep.subr.bf16.mxu0 0
        %1071 = vmatpush2.bf16.msra.mxu0 0
        %1072 = vmatprep.mubr.bf16.mxu0 0
        %1073 = vmatmul.mubr.bf16.gmra.mxu0 %v1026
        %v1074 = vpop.f32.mrf.mxu0
        %v1075 = vadd.f32 0.0, %v1074
        %v1076 = vpop.f32.mrf.mxu0
        %v1077 = vpop.f32.mrf.mxu0
        %v1078 = vadd.f32 0.0, %v1077
        %v1079 = vpop.f32.mrf.mxu0
        %1080 = vmatprep.mubr.bf16.mxu0 0
        %1081 = vmatmul.mubr.bf16.gmra.mxu0 %v1029
        %v1082 = vpop.f32.mrf.mxu0
        %v1083 = vadd.f32 0.0, %v1082
        %v1084 = vpop.f32.mrf.mxu0
        %v1085 = vpop.f32.mrf.mxu0
        %v1086 = vadd.f32 0.0, %v1085
        %v1087 = vpop.f32.mrf.mxu0
        %1088 = vmatprep.mubr.bf16.mxu0 0
        %1089 = vmatmul.mubr.bf16.gmra.mxu0 %v1032
        %v1090 = vpop.f32.mrf.mxu0
        %v1091 = vadd.f32 0.0, %v1090
        %v1092 = vpop.f32.mrf.mxu0
        %v1093 = vpop.f32.mrf.mxu0
        %v1094 = vadd.f32 0.0, %v1093
        %v1095 = vpop.f32.mrf.mxu0
        %1096 = vmatprep.mubr.bf16.mxu0 0
        %1097 = vmatmul.mubr.bf16.gmra.mxu0 %v1035
        %v1098 = vpop.f32.mrf.mxu0
        %v1099 = vadd.f32 0.0, %v1098
        %v1100 = vpop.f32.mrf.mxu0
        %v1101 = vpop.f32.mrf.mxu0
        %v1102 = vadd.f32 0.0, %v1101
        %v1103 = vpop.f32.mrf.mxu0
        %1104 = vmatprep.mubr.bf16.mxu0 0
        %1105 = vmatmul.mubr.bf16.gmra.mxu0 %v1038
        %v1106 = vpop.f32.mrf.mxu0
        %v1107 = vadd.f32 0.0, %v1106
        %v1108 = vpop.f32.mrf.mxu0
        %v1109 = vpop.f32.mrf.mxu0
        %v1110 = vadd.f32 0.0, %v1109
        %v1111 = vpop.f32.mrf.mxu0
        %1112 = vdwg.mxu0
        %v1117 = vunpack.c.l.b16 %v964
        %v1118 = vunpack.c.l.b16 %v965
        %v1119 = vunpack.c.l.b16 %v966
        %v1120 = vunpack.c.l.b16 %v967
        %v1121 = vpack.c.b16 %v1118, %v1117
        %v1122 = vpack.c.b16 %v1120, %v1119
        %v1125 = vsel %vm1024, %v959, 0
        %v1127 = vsel %vm1024, %v960, 0
        %v1129 = vsel %vm1024, %v961, 0
        %v1131 = vsel %vm1024, %v962, 0
        %v1133 = vsel %vm1024, %v963, 0
        %1135 = vmatprep.subr.bf16.mxu0 0
        %1136 = vmatpush1.bf16.msra.mxu0 0
        %1137 = vmatprep.subr.bf16.mxu0 0
        %1138 = vmatpush1.bf16.msra.mxu0 0
        %1139 = vmatprep.subr.bf16.mxu0 0
        %1140 = vmatpush1.bf16.msra.mxu0 0
        %1141 = vmatprep.subr.bf16.mxu0 0
        %1142 = vmatpush1.bf16.msra.mxu0 0
        %1143 = vmatprep.subr.bf16.mxu0 0
        %1144 = vmatpush1.bf16.msra.mxu0 0
        %1145 = vmatprep.subr.bf16.mxu0 0
        %1146 = vmatpush1.bf16.msra.mxu0 0
        %1147 = vmatprep.subr.bf16.mxu0 0
        %1148 = vmatpush1.bf16.msra.mxu0 %v1122
        %1149 = vmatprep.subr.bf16.mxu0 0
        %1150 = vmatpush1.bf16.msra.mxu0 %v1121
        %1151 = vmatprep.subr.bf16.mxu0 0
        %1152 = vmatpush2.bf16.msra.mxu0 0
        %1153 = vmatprep.subr.bf16.mxu0 0
        %1154 = vmatpush2.bf16.msra.mxu0 0
        %1155 = vmatprep.subr.bf16.mxu0 0
        %1156 = vmatpush2.bf16.msra.mxu0 0
        %1157 = vmatprep.subr.bf16.mxu0 0
        %1158 = vmatpush2.bf16.msra.mxu0 0
        %1159 = vmatprep.subr.bf16.mxu0 0
        %1160 = vmatpush2.bf16.msra.mxu0 0
        %1161 = vmatprep.subr.bf16.mxu0 0
        %1162 = vmatpush2.bf16.msra.mxu0 0
        %1163 = vmatprep.subr.bf16.mxu0 0
        %1164 = vmatpush2.bf16.msra.mxu0 0
        %1165 = vmatprep.subr.bf16.mxu0 0
        %1166 = vmatpush2.bf16.msra.mxu0 0
        %1167 = vmatprep.mubr.bf16.mxu0 0
        %1168 = vmatmul.mubr.bf16.gmra.mxu0 %v1125
        %v1169 = vpop.f32.mrf.mxu0
        %v1170 = vadd.f32 %v1075, %v1169
        %v1171 = vpop.f32.mrf.mxu0
        %v1172 = vpop.f32.mrf.mxu0
        %v1173 = vadd.f32 %v1078, %v1172
        %v1174 = vpop.f32.mrf.mxu0
        %1175 = vmatprep.mubr.bf16.mxu0 0
        %1176 = vmatmul.mubr.bf16.gmra.mxu0 %v1127
        %v1177 = vpop.f32.mrf.mxu0
        %v1178 = vadd.f32 %v1083, %v1177
        %v1179 = vpop.f32.mrf.mxu0
        %v1180 = vpop.f32.mrf.mxu0
        %v1181 = vadd.f32 %v1086, %v1180
        %v1182 = vpop.f32.mrf.mxu0
        %1183 = vmatprep.mubr.bf16.mxu0 0
        %1184 = vmatmul.mubr.bf16.gmra.mxu0 %v1129
        %v1185 = vpop.f32.mrf.mxu0
        %v1186 = vadd.f32 %v1091, %v1185
        %v1187 = vpop.f32.mrf.mxu0
        %v1188 = vpop.f32.mrf.mxu0
        %v1189 = vadd.f32 %v1094, %v1188
        %v1190 = vpop.f32.mrf.mxu0
        %1191 = vmatprep.mubr.bf16.mxu0 0
        %1192 = vmatmul.mubr.bf16.gmra.mxu0 %v1131
        %v1193 = vpop.f32.mrf.mxu0
        %v1194 = vadd.f32 %v1099, %v1193
        %v1195 = vpop.f32.mrf.mxu0
        %v1196 = vpop.f32.mrf.mxu0
        %v1197 = vadd.f32 %v1102, %v1196
        %v1198 = vpop.f32.mrf.mxu0
        %1199 = vmatprep.mubr.bf16.mxu0 0
        %1200 = vmatmul.mubr.bf16.gmra.mxu0 %v1133
        %v1201 = vpop.f32.mrf.mxu0
        %v1202 = vadd.f32 %v1107, %v1201
        %v1203 = vpop.f32.mrf.mxu0
        %v1204 = vpop.f32.mrf.mxu0
        %v1205 = vadd.f32 %v1110, %v1204
        %v1206 = vpop.f32.mrf.mxu0
        %1207 = vdwg.mxu0
        %v1208 = vld [vmem:[%s4 + $0x20] sm:$0xf]
        %v1209 = vld [vmem:[%s4 + $0x24] sm:$0xf]
        %v1210 = vld [vmem:[%s4 + $0x28] sm:$0xf]
        %v1211 = vld [vmem:[%s4 + $0x2c] sm:$0xf]
        %vm1217 = vcmask 1046528
        %v1218 = vrot.slane %v959, 1
        %v1219 = vrot.slane %v960, 1
        %v1220 = vsel %vm1217, %v1218, %v1219
        %v1221 = vrot.slane %v961, 1
        %v1222 = vsel %vm1217, %v1219, %v1221
        %v1223 = vrot.slane %v962, 1
        %v1224 = vsel %vm1217, %v1221, %v1223
        %v1225 = vrot.slane %v963, 1
        %v1226 = vsel %vm1217, %v1223, %v1225
        %v1231 = vunpack.c.l.b16 %v1208
        %v1232 = vunpack.c.l.b16 %v1209
        %v1233 = vunpack.c.l.b16 %v1210
        %v1234 = vunpack.c.l.b16 %v1211
        %v1235 = vpack.c.b16 %v1232, %v1231
        %v1236 = vpack.c.b16 %v1234, %v1233
        %v1240 = vsel %vm1024, %v1220, 0
        %v1243 = vsel %vm1024, %v1222, 0
        %v1246 = vsel %vm1024, %v1224, 0
        %v1249 = vsel %vm1024, %v1226, 0
        %v1252 = vsel %vm1024, %v1225, 0
        %1254 = vmatprep.subr.bf16.mxu0 0
        %1255 = vmatpush1.bf16.msra.mxu0 0
        %1256 = vmatprep.subr.bf16.mxu0 0
        %1257 = vmatpush1.bf16.msra.mxu0 0
        %1258 = vmatprep.subr.bf16.mxu0 0
        %1259 = vmatpush1.bf16.msra.mxu0 0
        %1260 = vmatprep.subr.bf16.mxu0 0
        %1261 = vmatpush1.bf16.msra.mxu0 0
        %1262 = vmatprep.subr.bf16.mxu0 0
        %1263 = vmatpush1.bf16.msra.mxu0 0
        %1264 = vmatprep.subr.bf16.mxu0 0
        %1265 = vmatpush1.bf16.msra.mxu0 0
        %1266 = vmatprep.subr.bf16.mxu0 0
        %1267 = vmatpush1.bf16.msra.mxu0 %v1236
        %1268 = vmatprep.subr.bf16.mxu0 0
        %1269 = vmatpush1.bf16.msra.mxu0 %v1235
        %1270 = vmatprep.subr.bf16.mxu0 0
        %1271 = vmatpush2.bf16.msra.mxu0 0
        %1272 = vmatprep.subr.bf16.mxu0 0
        %1273 = vmatpush2.bf16.msra.mxu0 0
        %1274 = vmatprep.subr.bf16.mxu0 0
        %1275 = vmatpush2.bf16.msra.mxu0 0
        %1276 = vmatprep.subr.bf16.mxu0 0
        %1277 = vmatpush2.bf16.msra.mxu0 0
        %1278 = vmatprep.subr.bf16.mxu0 0
        %1279 = vmatpush2.bf16.msra.mxu0 0
        %1280 = vmatprep.subr.bf16.mxu0 0
        %1281 = vmatpush2.bf16.msra.mxu0 0
        %1282 = vmatprep.subr.bf16.mxu0 0
        %1283 = vmatpush2.bf16.msra.mxu0 0
        %1284 = vmatprep.subr.bf16.mxu0 0
        %1285 = vmatpush2.bf16.msra.mxu0 0
        %1286 = vmatprep.mubr.bf16.mxu0 0
        %1287 = vmatmul.mubr.bf16.gmra.mxu0 %v1240
        %v1288 = vpop.f32.mrf.mxu0
        %v1289 = vadd.f32 0.0, %v1288
        %v1290 = vpop.f32.mrf.mxu0
        %v1291 = vpop.f32.mrf.mxu0
        %v1292 = vadd.f32 0.0, %v1291
        %v1293 = vpop.f32.mrf.mxu0
        %1294 = vmatprep.mubr.bf16.mxu0 0
        %1295 = vmatmul.mubr.bf16.gmra.mxu0 %v1243
        %v1296 = vpop.f32.mrf.mxu0
        %v1297 = vadd.f32 0.0, %v1296
        %v1298 = vpop.f32.mrf.mxu0
        %v1299 = vpop.f32.mrf.mxu0
        %v1300 = vadd.f32 0.0, %v1299
        %v1301 = vpop.f32.mrf.mxu0
        %1302 = vmatprep.mubr.bf16.mxu0 0
        %1303 = vmatmul.mubr.bf16.gmra.mxu0 %v1246
        %v1304 = vpop.f32.mrf.mxu0
        %v1305 = vadd.f32 0.0, %v1304
        %v1306 = vpop.f32.mrf.mxu0
        %v1307 = vpop.f32.mrf.mxu0
        %v1308 = vadd.f32 0.0, %v1307
        %v1309 = vpop.f32.mrf.mxu0
        %1310 = vmatprep.mubr.bf16.mxu0 0
        %1311 = vmatmul.mubr.bf16.gmra.mxu0 %v1249
        %v1312 = vpop.f32.mrf.mxu0
        %v1313 = vadd.f32 0.0, %v1312
        %v1314 = vpop.f32.mrf.mxu0
        %v1315 = vpop.f32.mrf.mxu0
        %v1316 = vadd.f32 0.0, %v1315
        %v1317 = vpop.f32.mrf.mxu0
        %1318 = vmatprep.mubr.bf16.mxu0 0
        %1319 = vmatmul.mubr.bf16.gmra.mxu0 %v1252
        %v1320 = vpop.f32.mrf.mxu0
        %v1321 = vadd.f32 0.0, %v1320
        %v1322 = vpop.f32.mrf.mxu0
        %v1323 = vpop.f32.mrf.mxu0
        %v1324 = vadd.f32 0.0, %v1323
        %v1325 = vpop.f32.mrf.mxu0
        %1326 = vdwg.mxu0
        %v1327 = vadd.f32 %v1170, %v1289
        %v1328 = vadd.f32 %v1173, %v1292
        %v1329 = vadd.f32 %v1178, %v1297
        %v1330 = vadd.f32 %v1181, %v1300
        %v1331 = vadd.f32 %v1186, %v1305
        %v1332 = vadd.f32 %v1189, %v1308
        %v1333 = vadd.f32 %v1194, %v1313
        %v1334 = vadd.f32 %v1197, %v1316
        %v1335 = vadd.f32 %v1202, %v1321
        %v1336 = vadd.f32 %v1205, %v1324
        %v1337 = vpack.c.bf16 %v906, %v901
        %v1338 = vpack.c.bf16 %v916, %v911
        %v1339 = vpack.c.bf16 %v926, %v921
        %v1340 = vpack.c.bf16 %v936, %v931
        %v1341 = vpack.c.bf16 %v946, %v941
        %v1342 = vld [vmem:[%s4 + $0x30] sm:$0xf]
        %v1343 = vld [vmem:[%s4 + $0x34] sm:$0xf]
        %v1344 = vld [vmem:[%s4 + $0x38] sm:$0xf]
        %v1345 = vld [vmem:[%s4 + $0x3c] sm:$0xf]
        %v1351 = vrot.slane %v1337, 1
        %v1352 = vrot.slane %v1338, 1
        %v1353 = vsel %vm1217, %v1351, %v1352
        %v1354 = vrot.slane %v1339, 1
        %v1355 = vsel %vm1217, %v1352, %v1354
        %v1356 = vrot.slane %v1340, 1
        %v1357 = vsel %vm1217, %v1354, %v1356
        %v1358 = vrot.slane %v1341, 1
        %v1359 = vsel %vm1217, %v1356, %v1358
        %v1364 = vunpack.c.l.b16 %v1342
        %v1365 = vunpack.c.l.b16 %v1343
        %v1366 = vunpack.c.l.b16 %v1344
        %v1367 = vunpack.c.l.b16 %v1345
        %v1368 = vpack.c.b16 %v1365, %v1364
        %v1369 = vpack.c.b16 %v1367, %v1366
        %v1373 = vsel %vm1024, %v1353, 0
        %v1376 = vsel %vm1024, %v1355, 0
        %v1379 = vsel %vm1024, %v1357, 0
        %v1382 = vsel %vm1024, %v1359, 0
        %v1385 = vsel %vm1024, %v1358, 0
        %1387 = vmatprep.subr.bf16.mxu0 0
        %1388 = vmatpush1.bf16.msra.mxu0 0
        %1389 = vmatprep.subr.bf16.mxu0 0
        %1390 = vmatpush1.bf16.msra.mxu0 0
        %1391 = vmatprep.subr.bf16.mxu0 0
        %1392 = vmatpush1.bf16.msra.mxu0 0
        %1393 = vmatprep.subr.bf16.mxu0 0
        %1394 = vmatpush1.bf16.msra.mxu0 0
        %1395 = vmatprep.subr.bf16.mxu0 0
        %1396 = vmatpush1.bf16.msra.mxu0 0
        %1397 = vmatprep.subr.bf16.mxu0 0
        %1398 = vmatpush1.bf16.msra.mxu0 0
        %1399 = vmatprep.subr.bf16.mxu0 0
        %1400 = vmatpush1.bf16.msra.mxu0 %v1369
        %1401 = vmatprep.subr.bf16.mxu0 0
        %1402 = vmatpush1.bf16.msra.mxu0 %v1368
        %1403 = vmatprep.subr.bf16.mxu0 0
        %1404 = vmatpush2.bf16.msra.mxu0 0
        %1405 = vmatprep.subr.bf16.mxu0 0
        %1406 = vmatpush2.bf16.msra.mxu0 0
        %1407 = vmatprep.subr.bf16.mxu0 0
        %1408 = vmatpush2.bf16.msra.mxu0 0
        %1409 = vmatprep.subr.bf16.mxu0 0
        %1410 = vmatpush2.bf16.msra.mxu0 0
        %1411 = vmatprep.subr.bf16.mxu0 0
        %1412 = vmatpush2.bf16.msra.mxu0 0
        %1413 = vmatprep.subr.bf16.mxu0 0
        %1414 = vmatpush2.bf16.msra.mxu0 0
        %1415 = vmatprep.subr.bf16.mxu0 0
        %1416 = vmatpush2.bf16.msra.mxu0 0
        %1417 = vmatprep.subr.bf16.mxu0 0
        %1418 = vmatpush2.bf16.msra.mxu0 0
        %1419 = vmatprep.mubr.bf16.mxu0 0
        %1420 = vmatmul.mubr.bf16.gmra.mxu0 %v1373
        %v1421 = vpop.f32.mrf.mxu0
        %v1422 = vadd.f32 0.0, %v1421
        %v1423 = vpop.f32.mrf.mxu0
        %v1424 = vpop.f32.mrf.mxu0
        %v1425 = vadd.f32 0.0, %v1424
        %v1426 = vpop.f32.mrf.mxu0
        %1427 = vmatprep.mubr.bf16.mxu0 0
        %1428 = vmatmul.mubr.bf16.gmra.mxu0 %v1376
        %v1429 = vpop.f32.mrf.mxu0
        %v1430 = vadd.f32 0.0, %v1429
        %v1431 = vpop.f32.mrf.mxu0
        %v1432 = vpop.f32.mrf.mxu0
        %v1433 = vadd.f32 0.0, %v1432
        %v1434 = vpop.f32.mrf.mxu0
        %1435 = vmatprep.mubr.bf16.mxu0 0
        %1436 = vmatmul.mubr.bf16.gmra.mxu0 %v1379
        %v1437 = vpop.f32.mrf.mxu0
        %v1438 = vadd.f32 0.0, %v1437
        %v1439 = vpop.f32.mrf.mxu0
        %v1440 = vpop.f32.mrf.mxu0
        %v1441 = vadd.f32 0.0, %v1440
        %v1442 = vpop.f32.mrf.mxu0
        %1443 = vmatprep.mubr.bf16.mxu0 0
        %1444 = vmatmul.mubr.bf16.gmra.mxu0 %v1382
        %v1445 = vpop.f32.mrf.mxu0
        %v1446 = vadd.f32 0.0, %v1445
        %v1447 = vpop.f32.mrf.mxu0
        %v1448 = vpop.f32.mrf.mxu0
        %v1449 = vadd.f32 0.0, %v1448
        %v1450 = vpop.f32.mrf.mxu0
        %1451 = vmatprep.mubr.bf16.mxu0 0
        %1452 = vmatmul.mubr.bf16.gmra.mxu0 %v1385
        %v1453 = vpop.f32.mrf.mxu0
        %v1454 = vadd.f32 0.0, %v1453
        %v1455 = vpop.f32.mrf.mxu0
        %v1456 = vpop.f32.mrf.mxu0
        %v1457 = vadd.f32 0.0, %v1456
        %v1458 = vpop.f32.mrf.mxu0
        %1459 = vdwg.mxu0
        %v1460 = vadd.f32 %v1327, %v1422
        %v1461 = vadd.f32 %v1328, %v1425
        %v1462 = vadd.f32 %v1329, %v1430
        %v1463 = vadd.f32 %v1330, %v1433
        %v1464 = vadd.f32 %v1331, %v1438
        %v1465 = vadd.f32 %v1332, %v1441
        %v1466 = vadd.f32 %v1333, %v1446
        %v1467 = vadd.f32 %v1334, %v1449
        %v1468 = vadd.f32 %v1335, %v1454
        %v1469 = vadd.f32 %v1336, %v1457
        %v1470 = vpack.c.bf16 %v951, %v951
        %v1471 = vld [vmem:[%s4 + $0x40] sm:$0xf]
        %v1472 = vld [vmem:[%s4 + $0x44] sm:$0xf]
        %v1473 = vld [vmem:[%s4 + $0x48] sm:$0xf]
        %v1474 = vld [vmem:[%s4 + $0x4c] sm:$0xf]
        %vm1475 = vsmask.f32 6400
        %v1477 = vshrl.u32 %v1337, 16
        %v1479 = vrot.slane %v1477, 1
        %v1480 = vshll.u32 %v1337, 16
        %v1482 = vrot.slane %v1480, 2
        %v1483 = vor.u32 %v1479, %v1482
        %v1485 = vshrl.u32 %v1338, 16
        %v1487 = vrot.slane %v1485, 1
        %v1488 = vshll.u32 %v1338, 16
        %v1490 = vrot.slane %v1488, 2
        %v1491 = vor.u32 %v1487, %v1490
        %v1492 = vsel %vm1475, %v1483, %v1491
        %v1494 = vshrl.u32 %v1339, 16
        %v1496 = vrot.slane %v1494, 1
        %v1497 = vshll.u32 %v1339, 16
        %v1499 = vrot.slane %v1497, 2
        %v1500 = vor.u32 %v1496, %v1499
        %v1501 = vsel %vm1475, %v1491, %v1500
        %v1503 = vshrl.u32 %v1340, 16
        %v1505 = vrot.slane %v1503, 1
        %v1506 = vshll.u32 %v1340, 16
        %v1508 = vrot.slane %v1506, 2
        %v1509 = vor.u32 %v1505, %v1508
        %v1510 = vsel %vm1475, %v1500, %v1509
        %v1512 = vshrl.u32 %v1341, 16
        %v1514 = vrot.slane %v1512, 1
        %v1515 = vshll.u32 %v1341, 16
        %v1517 = vrot.slane %v1515, 2
        %v1518 = vor.u32 %v1514, %v1517
        %v1519 = vsel %vm1475, %v1509, %v1518
        %v1521 = vshll.u32 %v1470, 16
        %v1523 = vrot.slane %v1521, 2
        %v1524 = vsel %vm1475, %v1518, %v1523
        %v1529 = vunpack.c.l.b16 %v1471
        %v1530 = vunpack.c.l.b16 %v1472
        %v1531 = vunpack.c.l.b16 %v1473
        %v1532 = vunpack.c.l.b16 %v1474
        %v1533 = vpack.c.b16 %v1530, %v1529
        %v1534 = vpack.c.b16 %v1532, %v1531
        %v1538 = vsel %vm1024, %v1492, 0
        %v1541 = vsel %vm1024, %v1501, 0
        %v1544 = vsel %vm1024, %v1510, 0
        %v1547 = vsel %vm1024, %v1519, 0
        %v1550 = vsel %vm1024, %v1524, 0
        %1552 = vmatprep.subr.bf16.mxu0 0
        %1553 = vmatpush1.bf16.msra.mxu0 0
        %1554 = vmatprep.subr.bf16.mxu0 0
        %1555 = vmatpush1.bf16.msra.mxu0 0
        %1556 = vmatprep.subr.bf16.mxu0 0
        %1557 = vmatpush1.bf16.msra.mxu0 0
        %1558 = vmatprep.subr.bf16.mxu0 0
        %1559 = vmatpush1.bf16.msra.mxu0 0
        %1560 = vmatprep.subr.bf16.mxu0 0
        %1561 = vmatpush1.bf16.msra.mxu0 0
        %1562 = vmatprep.subr.bf16.mxu0 0
        %1563 = vmatpush1.bf16.msra.mxu0 0
        %1564 = vmatprep.subr.bf16.mxu0 0
        %1565 = vmatpush1.bf16.msra.mxu0 %v1534
        %1566 = vmatprep.subr.bf16.mxu0 0
        %1567 = vmatpush1.bf16.msra.mxu0 %v1533
        %1568 = vmatprep.subr.bf16.mxu0 0
        %1569 = vmatpush2.bf16.msra.mxu0 0
        %1570 = vmatprep.subr.bf16.mxu0 0
        %1571 = vmatpush2.bf16.msra.mxu0 0
        %1572 = vmatprep.subr.bf16.mxu0 0
        %1573 = vmatpush2.bf16.msra.mxu0 0
        %1574 = vmatprep.subr.bf16.mxu0 0
        %1575 = vmatpush2.bf16.msra.mxu0 0
        %1576 = vmatprep.subr.bf16.mxu0 0
        %1577 = vmatpush2.bf16.msra.mxu0 0
        %1578 = vmatprep.subr.bf16.mxu0 0
        %1579 = vmatpush2.bf16.msra.mxu0 0
        %1580 = vmatprep.subr.bf16.mxu0 0
        %1581 = vmatpush2.bf16.msra.mxu0 0
        %1582 = vmatprep.subr.bf16.mxu0 0
        %1583 = vmatpush2.bf16.msra.mxu0 0
        %1584 = vmatprep.mubr.bf16.mxu0 0
        %1585 = vmatmul.mubr.bf16.gmra.mxu0 %v1538
        %v1586 = vpop.f32.mrf.mxu0
        %v1587 = vadd.f32 0.0, %v1586
        %v1588 = vpop.f32.mrf.mxu0
        %v1589 = vpop.f32.mrf.mxu0
        %v1590 = vadd.f32 0.0, %v1589
        %v1591 = vpop.f32.mrf.mxu0
        %1592 = vmatprep.mubr.bf16.mxu0 0
        %1593 = vmatmul.mubr.bf16.gmra.mxu0 %v1541
        %v1594 = vpop.f32.mrf.mxu0
        %v1595 = vadd.f32 0.0, %v1594
        %v1596 = vpop.f32.mrf.mxu0
        %v1597 = vpop.f32.mrf.mxu0
        %v1598 = vadd.f32 0.0, %v1597
        %v1599 = vpop.f32.mrf.mxu0
        %1600 = vmatprep.mubr.bf16.mxu0 0
        %1601 = vmatmul.mubr.bf16.gmra.mxu0 %v1544
        %v1602 = vpop.f32.mrf.mxu0
        %v1603 = vadd.f32 0.0, %v1602
        %v1604 = vpop.f32.mrf.mxu0
        %v1605 = vpop.f32.mrf.mxu0
        %v1606 = vadd.f32 0.0, %v1605
        %v1607 = vpop.f32.mrf.mxu0
        %1608 = vmatprep.mubr.bf16.mxu0 0
        %1609 = vmatmul.mubr.bf16.gmra.mxu0 %v1547
        %v1610 = vpop.f32.mrf.mxu0
        %v1611 = vadd.f32 0.0, %v1610
        %v1612 = vpop.f32.mrf.mxu0
        %v1613 = vpop.f32.mrf.mxu0
        %v1614 = vadd.f32 0.0, %v1613
        %v1615 = vpop.f32.mrf.mxu0
        %1616 = vmatprep.mubr.bf16.mxu0 0
        %1617 = vmatmul.mubr.bf16.gmra.mxu0 %v1550
        %v1618 = vpop.f32.mrf.mxu0
        %v1619 = vadd.f32 0.0, %v1618
        %v1620 = vpop.f32.mrf.mxu0
        %v1621 = vpop.f32.mrf.mxu0
        %v1622 = vadd.f32 0.0, %v1621
        %v1623 = vpop.f32.mrf.mxu0
        %1624 = vdwg.mxu0
        %v1625 = vadd.f32 %v1460, %v1587
        %v1626 = vadd.f32 %v1461, %v1590
        %v1627 = vadd.f32 %v1462, %v1595
        %v1628 = vadd.f32 %v1463, %v1598
        %v1629 = vadd.f32 %v1464, %v1603
        %v1630 = vadd.f32 %v1465, %v1606
        %v1631 = vadd.f32 %v1466, %v1611
        %v1632 = vadd.f32 %v1467, %v1614
        %v1633 = vadd.f32 %v1468, %v1619
        %v1634 = vadd.f32 %v1469, %v1622
        %v1635 = vld [vmem:[%s4 + $0x50] sm:$0xf]
        %v1636 = vld [vmem:[%s4 + $0x54] sm:$0xf]
        %v1637 = vld [vmem:[%s4 + $0x58] sm:$0xf]
        %v1638 = vld [vmem:[%s4 + $0x5c] sm:$0xf]
        %vm1640 = vcmask 1045504
        %v1641 = vrot.slane %v1337, 2
        %v1642 = vrot.slane %v1338, 2
        %v1643 = vsel %vm1640, %v1641, %v1642
        %v1644 = vrot.slane %v1339, 2
        %v1645 = vsel %vm1640, %v1642, %v1644
        %v1646 = vrot.slane %v1340, 2
        %v1647 = vsel %vm1640, %v1644, %v1646
        %v1648 = vrot.slane %v1341, 2
        %v1649 = vsel %vm1640, %v1646, %v1648
        %v1650 = vrot.slane %v1470, 2
        %v1651 = vsel %vm1640, %v1648, %v1650
        %v1656 = vunpack.c.l.b16 %v1635
        %v1657 = vunpack.c.l.b16 %v1636
        %v1658 = vunpack.c.l.b16 %v1637
        %v1659 = vunpack.c.l.b16 %v1638
        %v1660 = vpack.c.b16 %v1657, %v1656
        %v1661 = vpack.c.b16 %v1659, %v1658
        %v1665 = vsel %vm1024, %v1643, 0
        %v1668 = vsel %vm1024, %v1645, 0
        %v1671 = vsel %vm1024, %v1647, 0
        %v1674 = vsel %vm1024, %v1649, 0
        %v1677 = vsel %vm1024, %v1651, 0
        %1679 = vmatprep.subr.bf16.mxu0 0
        %1680 = vmatpush1.bf16.msra.mxu0 0
        %1681 = vmatprep.subr.bf16.mxu0 0
        %1682 = vmatpush1.bf16.msra.mxu0 0
        %1683 = vmatprep.subr.bf16.mxu0 0
        %1684 = vmatpush1.bf16.msra.mxu0 0
        %1685 = vmatprep.subr.bf16.mxu0 0
        %1686 = vmatpush1.bf16.msra.mxu0 0
        %1687 = vmatprep.subr.bf16.mxu0 0
        %1688 = vmatpush1.bf16.msra.mxu0 0
        %1689 = vmatprep.subr.bf16.mxu0 0
        %1690 = vmatpush1.bf16.msra.mxu0 0
        %1691 = vmatprep.subr.bf16.mxu0 0
        %1692 = vmatpush1.bf16.msra.mxu0 %v1661
        %1693 = vmatprep.subr.bf16.mxu0 0
        %1694 = vmatpush1.bf16.msra.mxu0 %v1660
        %1695 = vmatprep.subr.bf16.mxu0 0
        %1696 = vmatpush2.bf16.msra.mxu0 0
        %1697 = vmatprep.subr.bf16.mxu0 0
        %1698 = vmatpush2.bf16.msra.mxu0 0
        %1699 = vmatprep.subr.bf16.mxu0 0
        %1700 = vmatpush2.bf16.msra.mxu0 0
        %1701 = vmatprep.subr.bf16.mxu0 0
        %1702 = vmatpush2.bf16.msra.mxu0 0
        %1703 = vmatprep.subr.bf16.mxu0 0
        %1704 = vmatpush2.bf16.msra.mxu0 0
        %1705 = vmatprep.subr.bf16.mxu0 0
        %1706 = vmatpush2.bf16.msra.mxu0 0
        %1707 = vmatprep.subr.bf16.mxu0 0
        %1708 = vmatpush2.bf16.msra.mxu0 0
        %1709 = vmatprep.subr.bf16.mxu0 0
        %1710 = vmatpush2.bf16.msra.mxu0 0
        %1711 = vmatprep.mubr.bf16.mxu0 0
        %1712 = vmatmul.mubr.bf16.gmra.mxu0 %v1665
        %v1713 = vpop.f32.mrf.mxu0
        %v1714 = vadd.f32 0.0, %v1713
        %v1715 = vpop.f32.mrf.mxu0
        %v1716 = vpop.f32.mrf.mxu0
        %v1717 = vadd.f32 0.0, %v1716
        %v1718 = vpop.f32.mrf.mxu0
        %1719 = vmatprep.mubr.bf16.mxu0 0
        %1720 = vmatmul.mubr.bf16.gmra.mxu0 %v1668
        %v1721 = vpop.f32.mrf.mxu0
        %v1722 = vadd.f32 0.0, %v1721
        %v1723 = vpop.f32.mrf.mxu0
        %v1724 = vpop.f32.mrf.mxu0
        %v1725 = vadd.f32 0.0, %v1724
        %v1726 = vpop.f32.mrf.mxu0
        %1727 = vmatprep.mubr.bf16.mxu0 0
        %1728 = vmatmul.mubr.bf16.gmra.mxu0 %v1671
        %v1729 = vpop.f32.mrf.mxu0
        %v1730 = vadd.f32 0.0, %v1729
        %v1731 = vpop.f32.mrf.mxu0
        %v1732 = vpop.f32.mrf.mxu0
        %v1733 = vadd.f32 0.0, %v1732
        %v1734 = vpop.f32.mrf.mxu0
        %1735 = vmatprep.mubr.bf16.mxu0 0
        %1736 = vmatmul.mubr.bf16.gmra.mxu0 %v1674
        %v1737 = vpop.f32.mrf.mxu0
        %v1738 = vadd.f32 0.0, %v1737
        %v1739 = vpop.f32.mrf.mxu0
        %v1740 = vpop.f32.mrf.mxu0
        %v1741 = vadd.f32 0.0, %v1740
        %v1742 = vpop.f32.mrf.mxu0
        %1743 = vmatprep.mubr.bf16.mxu0 0
        %1744 = vmatmul.mubr.bf16.gmra.mxu0 %v1677
        %v1745 = vpop.f32.mrf.mxu0
        %v1746 = vadd.f32 0.0, %v1745
        %v1747 = vpop.f32.mrf.mxu0
        %v1748 = vpop.f32.mrf.mxu0
        %v1749 = vadd.f32 0.0, %v1748
        %v1750 = vpop.f32.mrf.mxu0
        %1751 = vdwg.mxu0
        %v1752 = vadd.f32 %v1625, %v1714
        %v1753 = vadd.f32 %v1626, %v1717
        %v1754 = vadd.f32 %v1627, %v1722
        %v1755 = vadd.f32 %v1628, %v1725
        %v1756 = vadd.f32 %v1629, %v1730
        %v1757 = vadd.f32 %v1630, %v1733
        %v1758 = vadd.f32 %v1631, %v1738
        %v1759 = vadd.f32 %v1632, %v1741
        %v1760 = vadd.f32 %v1633, %v1746
        %v1761 = vadd.f32 %v1634, %v1749
        %v1762 = vpack.c.bf16 %v951, %v946
        %v1763 = vpack.c.bf16 %v956, %v956
        %v1764 = vld [vmem:[%s4 + $0x60] sm:$0xf]
        %v1765 = vld [vmem:[%s4 + $0x64] sm:$0xf]
        %v1766 = vld [vmem:[%s4 + $0x68] sm:$0xf]
        %v1767 = vld [vmem:[%s4 + $0x6c] sm:$0xf]
        %v1770 = vrot.slane %v960, 2
        %v1771 = vrot.slane %v961, 2
        %v1772 = vsel %vm1640, %v1770, %v1771
        %v1773 = vrot.slane %v962, 2
        %v1774 = vsel %vm1640, %v1771, %v1773
        %v1775 = vrot.slane %v963, 2
        %v1776 = vsel %vm1640, %v1773, %v1775
        %v1777 = vrot.slane %v1762, 2
        %v1778 = vsel %vm1640, %v1775, %v1777
        %v1779 = vrot.slane %v1763, 2
        %v1780 = vsel %vm1640, %v1777, %v1779
        %v1785 = vunpack.c.l.b16 %v1764
        %v1786 = vunpack.c.l.b16 %v1765
        %v1787 = vunpack.c.l.b16 %v1766
        %v1788 = vunpack.c.l.b16 %v1767
        %v1789 = vpack.c.b16 %v1786, %v1785
        %v1790 = vpack.c.b16 %v1788, %v1787
        %v1794 = vsel %vm1024, %v1772, 0
        %v1797 = vsel %vm1024, %v1774, 0
        %v1800 = vsel %vm1024, %v1776, 0
        %v1803 = vsel %vm1024, %v1778, 0
        %v1806 = vsel %vm1024, %v1780, 0
        %1808 = vmatprep.subr.bf16.mxu0 0
        %1809 = vmatpush1.bf16.msra.mxu0 0
        %1810 = vmatprep.subr.bf16.mxu0 0
        %1811 = vmatpush1.bf16.msra.mxu0 0
        %1812 = vmatprep.subr.bf16.mxu0 0
        %1813 = vmatpush1.bf16.msra.mxu0 0
        %1814 = vmatprep.subr.bf16.mxu0 0
        %1815 = vmatpush1.bf16.msra.mxu0 0
        %1816 = vmatprep.subr.bf16.mxu0 0
        %1817 = vmatpush1.bf16.msra.mxu0 0
        %1818 = vmatprep.subr.bf16.mxu0 0
        %1819 = vmatpush1.bf16.msra.mxu0 0
        %1820 = vmatprep.subr.bf16.mxu0 0
        %1821 = vmatpush1.bf16.msra.mxu0 %v1790
        %1822 = vmatprep.subr.bf16.mxu0 0
        %1823 = vmatpush1.bf16.msra.mxu0 %v1789
        %1824 = vmatprep.subr.bf16.mxu0 0
        %1825 = vmatpush2.bf16.msra.mxu0 0
        %1826 = vmatprep.subr.bf16.mxu0 0
        %1827 = vmatpush2.bf16.msra.mxu0 0
        %1828 = vmatprep.subr.bf16.mxu0 0
        %1829 = vmatpush2.bf16.msra.mxu0 0
        %1830 = vmatprep.subr.bf16.mxu0 0
        %1831 = vmatpush2.bf16.msra.mxu0 0
        %1832 = vmatprep.subr.bf16.mxu0 0
        %1833 = vmatpush2.bf16.msra.mxu0 0
        %1834 = vmatprep.subr.bf16.mxu0 0
        %1835 = vmatpush2.bf16.msra.mxu0 0
        %1836 = vmatprep.subr.bf16.mxu0 0
        %1837 = vmatpush2.bf16.msra.mxu0 0
        %1838 = vmatprep.subr.bf16.mxu0 0
        %1839 = vmatpush2.bf16.msra.mxu0 0
        %1840 = vmatprep.mubr.bf16.mxu0 0
        %1841 = vmatmul.mubr.bf16.gmra.mxu0 %v1794
        %v1842 = vpop.f32.mrf.mxu0
        %v1843 = vadd.f32 0.0, %v1842
        %v1844 = vpop.f32.mrf.mxu0
        %v1845 = vpop.f32.mrf.mxu0
        %v1846 = vadd.f32 0.0, %v1845
        %v1847 = vpop.f32.mrf.mxu0
        %1848 = vmatprep.mubr.bf16.mxu0 0
        %1849 = vmatmul.mubr.bf16.gmra.mxu0 %v1797
        %v1850 = vpop.f32.mrf.mxu0
        %v1851 = vadd.f32 0.0, %v1850
        %v1852 = vpop.f32.mrf.mxu0
        %v1853 = vpop.f32.mrf.mxu0
        %v1854 = vadd.f32 0.0, %v1853
        %v1855 = vpop.f32.mrf.mxu0
        %1856 = vmatprep.mubr.bf16.mxu0 0
        %1857 = vmatmul.mubr.bf16.gmra.mxu0 %v1800
        %v1858 = vpop.f32.mrf.mxu0
        %v1859 = vadd.f32 0.0, %v1858
        %v1860 = vpop.f32.mrf.mxu0
        %v1861 = vpop.f32.mrf.mxu0
        %v1862 = vadd.f32 0.0, %v1861
        %v1863 = vpop.f32.mrf.mxu0
        %1864 = vmatprep.mubr.bf16.mxu0 0
        %1865 = vmatmul.mubr.bf16.gmra.mxu0 %v1803
        %v1866 = vpop.f32.mrf.mxu0
        %v1867 = vadd.f32 0.0, %v1866
        %v1868 = vpop.f32.mrf.mxu0
        %v1869 = vpop.f32.mrf.mxu0
        %v1870 = vadd.f32 0.0, %v1869
        %v1871 = vpop.f32.mrf.mxu0
        %1872 = vmatprep.mubr.bf16.mxu0 0
        %1873 = vmatmul.mubr.bf16.gmra.mxu0 %v1806
        %v1874 = vpop.f32.mrf.mxu0
        %v1875 = vadd.f32 0.0, %v1874
        %v1876 = vpop.f32.mrf.mxu0
        %v1877 = vpop.f32.mrf.mxu0
        %v1878 = vadd.f32 0.0, %v1877
        %v1879 = vpop.f32.mrf.mxu0
        %1880 = vdwg.mxu0
        %v1881 = vadd.f32 %v1752, %v1843
        %v1882 = vadd.f32 %v1753, %v1846
        %v1883 = vadd.f32 %v1754, %v1851
        %v1884 = vadd.f32 %v1755, %v1854
        %v1885 = vadd.f32 %v1756, %v1859
        %v1886 = vadd.f32 %v1757, %v1862
        %v1887 = vadd.f32 %v1758, %v1867
        %v1888 = vadd.f32 %v1759, %v1870
        %v1889 = vadd.f32 %v1760, %v1875
        %v1890 = vadd.f32 %v1761, %v1878
        %v1891 = vld [vmem:[%s4 + $0x70] sm:$0xf]
        %v1892 = vld [vmem:[%s4 + $0x74] sm:$0xf]
        %v1893 = vld [vmem:[%s4 + $0x78] sm:$0xf]
        %v1894 = vld [vmem:[%s4 + $0x7c] sm:$0xf]
        %vm1895 = vsmask.f32 5376
        %v1896 = vrot.slane %v985, 2
        %v1897 = vrot.slane %v981, 3
        %v1898 = vor.u32 %v1896, %v1897
        %v1899 = vrot.slane %v993, 2
        %v1900 = vrot.slane %v989, 3
        %v1901 = vor.u32 %v1899, %v1900
        %v1902 = vsel %vm1895, %v1898, %v1901
        %v1903 = vrot.slane %v1001, 2
        %v1904 = vrot.slane %v997, 3
        %v1905 = vor.u32 %v1903, %v1904
        %v1906 = vsel %vm1895, %v1901, %v1905
        %v1907 = vrot.slane %v1009, 2
        %v1908 = vrot.slane %v1005, 3
        %v1909 = vor.u32 %v1907, %v1908
        %v1910 = vsel %vm1895, %v1905, %v1909
        %v1912 = vshrl.u32 %v1762, 16
        %v1914 = vrot.slane %v1912, 2
        %v1915 = vshll.u32 %v1762, 16
        %v1917 = vrot.slane %v1915, 3
        %v1918 = vor.u32 %v1914, %v1917
        %v1919 = vsel %vm1895, %v1909, %v1918
        %v1921 = vshrl.u32 %v1763, 16
        %v1923 = vrot.slane %v1921, 2
        %v1924 = vshll.u32 %v1763, 16
        %v1926 = vrot.slane %v1924, 3
        %v1927 = vor.u32 %v1923, %v1926
        %v1928 = vsel %vm1895, %v1918, %v1927
        %v1933 = vunpack.c.l.b16 %v1891
        %v1934 = vunpack.c.l.b16 %v1892
        %v1935 = vunpack.c.l.b16 %v1893
        %v1936 = vunpack.c.l.b16 %v1894
        %v1937 = vpack.c.b16 %v1934, %v1933
        %v1938 = vpack.c.b16 %v1936, %v1935
        %v1942 = vsel %vm1024, %v1902, 0
        %v1945 = vsel %vm1024, %v1906, 0
        %v1948 = vsel %vm1024, %v1910, 0
        %v1951 = vsel %vm1024, %v1919, 0
        %v1954 = vsel %vm1024, %v1928, 0
        %1956 = vmatprep.subr.bf16.mxu0 0
        %1957 = vmatpush1.bf16.msra.mxu0 0
        %1958 = vmatprep.subr.bf16.mxu0 0
        %1959 = vmatpush1.bf16.msra.mxu0 0
        %1960 = vmatprep.subr.bf16.mxu0 0
        %1961 = vmatpush1.bf16.msra.mxu0 0
        %1962 = vmatprep.subr.bf16.mxu0 0
        %1963 = vmatpush1.bf16.msra.mxu0 0
        %1964 = vmatprep.subr.bf16.mxu0 0
        %1965 = vmatpush1.bf16.msra.mxu0 0
        %1966 = vmatprep.subr.bf16.mxu0 0
        %1967 = vmatpush1.bf16.msra.mxu0 0
        %1968 = vmatprep.subr.bf16.mxu0 0
        %1969 = vmatpush1.bf16.msra.mxu0 %v1938
        %1970 = vmatprep.subr.bf16.mxu0 0
        %1971 = vmatpush1.bf16.msra.mxu0 %v1937
        %1972 = vmatprep.subr.bf16.mxu0 0
        %1973 = vmatpush2.bf16.msra.mxu0 0
        %1974 = vmatprep.subr.bf16.mxu0 0
        %1975 = vmatpush2.bf16.msra.mxu0 0
        %1976 = vmatprep.subr.bf16.mxu0 0
        %1977 = vmatpush2.bf16.msra.mxu0 0
        %1978 = vmatprep.subr.bf16.mxu0 0
        %1979 = vmatpush2.bf16.msra.mxu0 0
        %1980 = vmatprep.subr.bf16.mxu0 0
        %1981 = vmatpush2.bf16.msra.mxu0 0
        %1982 = vmatprep.subr.bf16.mxu0 0
        %1983 = vmatpush2.bf16.msra.mxu0 0
        %1984 = vmatprep.subr.bf16.mxu0 0
        %1985 = vmatpush2.bf16.msra.mxu0 0
        %1986 = vmatprep.subr.bf16.mxu0 0
        %1987 = vmatpush2.bf16.msra.mxu0 0
        %1988 = vmatprep.mubr.bf16.mxu0 0
        %1989 = vmatmul.mubr.bf16.gmra.mxu0 %v1942
        %v1990 = vpop.f32.mrf.mxu0
        %v1991 = vadd.f32 0.0, %v1990
        %v1992 = vpop.f32.mrf.mxu0
        %v1993 = vpop.f32.mrf.mxu0
        %v1994 = vadd.f32 0.0, %v1993
        %v1995 = vpop.f32.mrf.mxu0
        %1996 = vmatprep.mubr.bf16.mxu0 0
        %1997 = vmatmul.mubr.bf16.gmra.mxu0 %v1945
        %v1998 = vpop.f32.mrf.mxu0
        %v1999 = vadd.f32 0.0, %v1998
        %v2000 = vpop.f32.mrf.mxu0
        %v2001 = vpop.f32.mrf.mxu0
        %v2002 = vadd.f32 0.0, %v2001
        %v2003 = vpop.f32.mrf.mxu0
        %2004 = vmatprep.mubr.bf16.mxu0 0
        %2005 = vmatmul.mubr.bf16.gmra.mxu0 %v1948
        %v2006 = vpop.f32.mrf.mxu0
        %v2007 = vadd.f32 0.0, %v2006
        %v2008 = vpop.f32.mrf.mxu0
        %v2009 = vpop.f32.mrf.mxu0
        %v2010 = vadd.f32 0.0, %v2009
        %v2011 = vpop.f32.mrf.mxu0
        %2012 = vmatprep.mubr.bf16.mxu0 0
        %2013 = vmatmul.mubr.bf16.gmra.mxu0 %v1951
        %v2014 = vpop.f32.mrf.mxu0
        %v2015 = vadd.f32 0.0, %v2014
        %v2016 = vpop.f32.mrf.mxu0
        %v2017 = vpop.f32.mrf.mxu0
        %v2018 = vadd.f32 0.0, %v2017
        %v2019 = vpop.f32.mrf.mxu0
        %2020 = vmatprep.mubr.bf16.mxu0 0
        %2021 = vmatmul.mubr.bf16.gmra.mxu0 %v1954
        %v2022 = vpop.f32.mrf.mxu0
        %v2023 = vadd.f32 0.0, %v2022
        %v2024 = vpop.f32.mrf.mxu0
        %v2025 = vpop.f32.mrf.mxu0
        %v2026 = vadd.f32 0.0, %v2025
        %v2027 = vpop.f32.mrf.mxu0
        %2028 = vdwg.mxu0
        %v2029 = vadd.f32 %v1881, %v1991
        %v2030 = vadd.f32 %v1882, %v1994
        %v2031 = vadd.f32 %v1883, %v1999
        %v2032 = vadd.f32 %v1884, %v2002
        %v2033 = vadd.f32 %v1885, %v2007
        %v2034 = vadd.f32 %v1886, %v2010
        %v2035 = vadd.f32 %v1887, %v2015
        %v2036 = vadd.f32 %v1888, %v2018
        %v2037 = vadd.f32 %v1889, %v2023
        %v2038 = vadd.f32 %v1890, %v2026
        %v2039 = vld [vmem:[%s4 + $0x80] sm:$0xf]
        %v2040 = vld [vmem:[%s4 + $0x84] sm:$0xf]
        %v2041 = vld [vmem:[%s4 + $0x88] sm:$0xf]
        %v2042 = vld [vmem:[%s4 + $0x8c] sm:$0xf]
        %vm2043 = vcmask 1044480
        %v2044 = vrot.slane %v960, 3
        %v2045 = vrot.slane %v961, 3
        %v2046 = vsel %vm2043, %v2044, %v2045
        %v2047 = vrot.slane %v962, 3
        %v2048 = vsel %vm2043, %v2045, %v2047
        %v2049 = vrot.slane %v963, 3
        %v2050 = vsel %vm2043, %v2047, %v2049
        %v2051 = vrot.slane %v1762, 3
        %v2052 = vsel %vm2043, %v2049, %v2051
        %v2053 = vrot.slane %v1763, 3
        %v2054 = vsel %vm2043, %v2051, %v2053
        %v2059 = vunpack.c.l.b16 %v2039
        %v2060 = vunpack.c.l.b16 %v2040
        %v2061 = vunpack.c.l.b16 %v2041
        %v2062 = vunpack.c.l.b16 %v2042
        %v2063 = vpack.c.b16 %v2060, %v2059
        %v2064 = vpack.c.b16 %v2062, %v2061
        %v2068 = vsel %vm1024, %v2046, 0
        %v2071 = vsel %vm1024, %v2048, 0
        %v2074 = vsel %vm1024, %v2050, 0
        %v2077 = vsel %vm1024, %v2052, 0
        %v2080 = vsel %vm1024, %v2054, 0
        %2082 = vmatprep.subr.bf16.mxu0 0
        %2083 = vmatpush1.bf16.msra.mxu0 0
        %2084 = vmatprep.subr.bf16.mxu0 0
        %2085 = vmatpush1.bf16.msra.mxu0 0
        %2086 = vmatprep.subr.bf16.mxu0 0
        %2087 = vmatpush1.bf16.msra.mxu0 0
        %2088 = vmatprep.subr.bf16.mxu0 0
        %2089 = vmatpush1.bf16.msra.mxu0 0
        %2090 = vmatprep.subr.bf16.mxu0 0
        %2091 = vmatpush1.bf16.msra.mxu0 0
        %2092 = vmatprep.subr.bf16.mxu0 0
        %2093 = vmatpush1.bf16.msra.mxu0 0
        %2094 = vmatprep.subr.bf16.mxu0 0
        %2095 = vmatpush1.bf16.msra.mxu0 %v2064
        %2096 = vmatprep.subr.bf16.mxu0 0
        %2097 = vmatpush1.bf16.msra.mxu0 %v2063
        %2098 = vmatprep.subr.bf16.mxu0 0
        %2099 = vmatpush2.bf16.msra.mxu0 0
        %2100 = vmatprep.subr.bf16.mxu0 0
        %2101 = vmatpush2.bf16.msra.mxu0 0
        %2102 = vmatprep.subr.bf16.mxu0 0
        %2103 = vmatpush2.bf16.msra.mxu0 0
        %2104 = vmatprep.subr.bf16.mxu0 0
        %2105 = vmatpush2.bf16.msra.mxu0 0
        %2106 = vmatprep.subr.bf16.mxu0 0
        %2107 = vmatpush2.bf16.msra.mxu0 0
        %2108 = vmatprep.subr.bf16.mxu0 0
        %2109 = vmatpush2.bf16.msra.mxu0 0
        %2110 = vmatprep.subr.bf16.mxu0 0
        %2111 = vmatpush2.bf16.msra.mxu0 0
        %2112 = vmatprep.subr.bf16.mxu0 0
        %2113 = vmatpush2.bf16.msra.mxu0 0
        %2114 = vmatprep.mubr.bf16.mxu0 0
        %2115 = vmatmul.mubr.bf16.gmra.mxu0 %v2068
        %v2116 = vpop.f32.mrf.mxu0
        %v2117 = vadd.f32 0.0, %v2116
        %v2118 = vpop.f32.mrf.mxu0
        %v2119 = vpop.f32.mrf.mxu0
        %v2120 = vadd.f32 0.0, %v2119
        %v2121 = vpop.f32.mrf.mxu0
        %2122 = vmatprep.mubr.bf16.mxu0 0
        %2123 = vmatmul.mubr.bf16.gmra.mxu0 %v2071
        %v2124 = vpop.f32.mrf.mxu0
        %v2125 = vadd.f32 0.0, %v2124
        %v2126 = vpop.f32.mrf.mxu0
        %v2127 = vpop.f32.mrf.mxu0
        %v2128 = vadd.f32 0.0, %v2127
        %v2129 = vpop.f32.mrf.mxu0
        %2130 = vmatprep.mubr.bf16.mxu0 0
        %2131 = vmatmul.mubr.bf16.gmra.mxu0 %v2074
        %v2132 = vpop.f32.mrf.mxu0
        %v2133 = vadd.f32 0.0, %v2132
        %v2134 = vpop.f32.mrf.mxu0
        %v2135 = vpop.f32.mrf.mxu0
        %v2136 = vadd.f32 0.0, %v2135
        %v2137 = vpop.f32.mrf.mxu0
        %2138 = vmatprep.mubr.bf16.mxu0 0
        %2139 = vmatmul.mubr.bf16.gmra.mxu0 %v2077
        %v2140 = vpop.f32.mrf.mxu0
        %v2141 = vadd.f32 0.0, %v2140
        %v2142 = vpop.f32.mrf.mxu0
        %v2143 = vpop.f32.mrf.mxu0
        %v2144 = vadd.f32 0.0, %v2143
        %v2145 = vpop.f32.mrf.mxu0
        %2146 = vmatprep.mubr.bf16.mxu0 0
        %2147 = vmatmul.mubr.bf16.gmra.mxu0 %v2080
        %v2148 = vpop.f32.mrf.mxu0
        %v2149 = vadd.f32 0.0, %v2148
        %v2150 = vpop.f32.mrf.mxu0
        %v2151 = vpop.f32.mrf.mxu0
        %v2152 = vadd.f32 0.0, %v2151
        %v2153 = vpop.f32.mrf.mxu0
        %2154 = vdwg.mxu0
        %v2155 = vadd.f32 %v2029, %v2117
        %v2156 = vadd.f32 %v2030, %v2120
        %v2157 = vadd.f32 %v2031, %v2125
        %v2158 = vadd.f32 %v2032, %v2128
        %v2159 = vadd.f32 %v2033, %v2133
        %v2160 = vadd.f32 %v2034, %v2136
        %v2161 = vadd.f32 %v2035, %v2141
        %v2162 = vadd.f32 %v2036, %v2144
        %v2163 = vadd.f32 %v2037, %v2149
        %v2164 = vadd.f32 %v2038, %v2152
        %vm2175 = vcmask 1046528
        %v2176 = vrot.slane %v2155, 1
        %v2177 = vrot.slane %v2156, 1
        %v2178 = vsel %vm2175, %v2176, %v2177
        %v2179 = vrot.slane %v2157, 1
        %v2180 = vsel %vm2175, %v2177, %v2179
        %v2181 = vrot.slane %v2158, 1
        %v2182 = vsel %vm2175, %v2179, %v2181
        %v2183 = vrot.slane %v2159, 1
        %v2184 = vsel %vm2175, %v2181, %v2183
        %v2185 = vrot.slane %v2160, 1
        %v2186 = vsel %vm2175, %v2183, %v2185
        %v2187 = vrot.slane %v2161, 1
        %v2188 = vsel %vm2175, %v2185, %v2187
        %v2189 = vrot.slane %v2162, 1
        %v2190 = vsel %vm2175, %v2187, %v2189
        %v2191 = vrot.slane %v2163, 1
        %v2192 = vsel %vm2175, %v2189, %v2191
        %v2193 = vrot.slane %v2164, 1
        %v2194 = vsel %vm2175, %v2191, %v2193
        %v2205 = vmax.f32 %v2155, %v2178
        %v2206 = vmax.f32 %v2156, %v2180
        %v2207 = vmax.f32 %v2157, %v2182
        %v2208 = vmax.f32 %v2158, %v2184
        %v2209 = vmax.f32 %v2159, %v2186
        %v2210 = vmax.f32 %v2160, %v2188
        %v2211 = vmax.f32 %v2161, %v2190
        %v2212 = vmax.f32 %v2162, %v2192
        %v2213 = vmax.f32 %v2163, %v2194
        %v2214 = vmax.f32 %v2164, %v2193
        %v2224 = vrot.slane %v2206, 2
        %v2225 = vrot.slane %v2207, 2
        %v2226 = vsel %vm562, %v2224, %v2225
        %v2227 = vrot.slane %v2208, 2
        %v2228 = vsel %vm562, %v2225, %v2227
        %v2229 = vrot.slane %v2209, 2
        %v2230 = vsel %vm562, %v2227, %v2229
        %v2231 = vrot.slane %v2210, 2
        %v2232 = vsel %vm562, %v2229, %v2231
        %v2233 = vrot.slane %v2211, 2
        %v2234 = vsel %vm562, %v2231, %v2233
        %v2235 = vrot.slane %v2212, 2
        %v2236 = vsel %vm562, %v2233, %v2235
        %v2237 = vrot.slane %v2213, 2
        %v2238 = vsel %vm562, %v2235, %v2237
        %v2239 = vrot.slane %v2214, 2
        %v2240 = vsel %vm562, %v2237, %v2239
        %v2250 = vmax.f32 %v2205, %v2226
        %v2251 = vmax.f32 %v2206, %v2228
        %v2252 = vmax.f32 %v2207, %v2230
        %v2253 = vmax.f32 %v2208, %v2232
        %v2254 = vmax.f32 %v2209, %v2234
        %v2255 = vmax.f32 %v2210, %v2236
        %v2256 = vmax.f32 %v2211, %v2238
        %v2257 = vmax.f32 %v2212, %v2240
        %v2258 = vmax.f32 %v2213, %v2239
        %v2259 = vld [vmem:[%s5] sm:$0x1]
        %v2261 = vlaneseq
        %v2262 = vshrl.u32 %v2261, 7
        %v2263 = vsub.s32 0, %v2262
        %v2264 = vrot.slane %v2259, %v2263
        %v2266 = vadd.f32 %v2250, %v2264
        %v2267 = vadd.f32 %v2251, %v2264
        %v2268 = vadd.f32 %v2252, %v2264
        %v2269 = vadd.f32 %v2253, %v2264
        %v2270 = vadd.f32 %v2254, %v2264
        %v2271 = vadd.f32 %v2255, %v2264
        %v2272 = vadd.f32 %v2256, %v2264
        %v2273 = vadd.f32 %v2257, %v2264
        %v2274 = vadd.f32 %v2258, %v2264
        %v2275 = vmax.f32 %v2266, 0.0
        %v2276 = vmax.f32 %v2267, 0.0
        %v2277 = vmax.f32 %v2268, 0.0
        %v2278 = vmax.f32 %v2269, 0.0
        %v2279 = vmax.f32 %v2270, 0.0
        %v2280 = vmax.f32 %v2271, 0.0
        %v2281 = vmax.f32 %v2272, 0.0
        %v2282 = vmax.f32 %v2273, 0.0
        %v2283 = vmax.f32 %v2274, 0.0
        %v2284 = vld [vmem:[%s6] sm:$0x1]
        %vm2285 = vcmask 547840
        %v2287 = vsel %vm2285, %v2284, 0
        %vm2289 = vcmask 1042432
        %v2291 = vsel %vm2289, %v2283, 0
        %2293 = vmatprep.subr.mxu0 0.0
        %2294 = vmatpush1.msra.mxu0 0.0
        %2295 = vmatprep.subr.mxu0 0.0
        %2296 = vmatpush1.msra.mxu0 0.0
        %2297 = vmatprep.subr.mxu0 0.0
        %2298 = vmatpush1.msra.mxu0 0.0
        %2299 = vmatprep.subr.mxu0 0.0
        %2300 = vmatpush1.msra.mxu0 0.0
        %2301 = vmatprep.subr.mxu0 0.0
        %2302 = vmatpush1.msra.mxu0 0.0
        %2303 = vmatprep.subr.mxu0 0.0
        %2304 = vmatpush1.msra.mxu0 0.0
        %2305 = vmatprep.subr.mxu0 0.0
        %2306 = vmatpush1.msra.mxu0 0.0
        %2307 = vmatprep.subr.mxu0 0.0
        %2308 = vmatpush1.msra.mxu0 %v2291
        %2309 = vmatprep.subr.mxu0 0.0
        %2310 = vmatpush1.msra.mxu0 %v2282
        %2311 = vmatprep.subr.mxu0 0.0
        %2312 = vmatpush1.msra.mxu0 %v2281
        %2313 = vmatprep.subr.mxu0 0.0
        %2314 = vmatpush1.msra.mxu0 %v2280
        %2315 = vmatprep.subr.mxu0 0.0
        %2316 = vmatpush1.msra.mxu0 %v2279
        %2317 = vmatprep.subr.mxu0 0.0
        %2318 = vmatpush1.msra.mxu0 %v2278
        %2319 = vmatprep.subr.mxu0 0.0
        %2320 = vmatpush1.msra.mxu0 %v2277
        %2321 = vmatprep.subr.mxu0 0.0
        %2322 = vmatpush1.msra.mxu0 %v2276
        %2323 = vmatprep.subr.mxu0 0.0
        %2324 = vmatpush1.msra.mxu0 %v2275
        %2325 = vmatprep.subr.mxu0 0.0
        %2326 = vmatpush2.msra.mxu0 0.0
        %2327 = vmatprep.subr.mxu0 0.0
        %2328 = vmatpush2.msra.mxu0 0.0
        %2329 = vmatprep.subr.mxu0 0.0
        %2330 = vmatpush2.msra.mxu0 0.0
        %2331 = vmatprep.subr.mxu0 0.0
        %2332 = vmatpush2.msra.mxu0 0.0
        %2333 = vmatprep.subr.mxu0 0.0
        %2334 = vmatpush2.msra.mxu0 0.0
        %2335 = vmatprep.subr.mxu0 0.0
        %2336 = vmatpush2.msra.mxu0 0.0
        %2337 = vmatprep.subr.mxu0 0.0
        %2338 = vmatpush2.msra.mxu0 0.0
        %2339 = vmatprep.subr.mxu0 0.0
        %2340 = vmatpush2.msra.mxu0 0.0
        %2341 = vmatprep.subr.mxu0 0.0
        %2342 = vmatpush2.msra.mxu0 0.0
        %2343 = vmatprep.subr.mxu0 0.0
        %2344 = vmatpush2.msra.mxu0 0.0
        %2345 = vmatprep.subr.mxu0 0.0
        %2346 = vmatpush2.msra.mxu0 0.0
        %2347 = vmatprep.subr.mxu0 0.0
        %2348 = vmatpush2.msra.mxu0 0.0
        %2349 = vmatprep.subr.mxu0 0.0
        %2350 = vmatpush2.msra.mxu0 0.0
        %2351 = vmatprep.subr.mxu0 0.0
        %2352 = vmatpush2.msra.mxu0 0.0
        %2353 = vmatprep.subr.mxu0 0.0
        %2354 = vmatpush2.msra.mxu0 0.0
        %2355 = vmatprep.subr.mxu0 0.0
        %2356 = vmatpush2.msra.mxu0 0.0
        %2357 = vmatprep.mubr.f32.mxu0 0.0
        %2358 = vmatmul.mubr.f32.gmra.mxu0 %v2287
        %v2359 = vpop.f32.mrf.mxu0
        %v2360 = vadd.f32 0.0, %v2359
        %v2361 = vpop.f32.mrf.mxu0
        %2362 = vdwg.mxu0
        %v2363 = vld [vmem:[%s7] sm:$0xff]
        %v2364 = vld [vmem:[%s7 + $0x8] sm:$0xff]
        %v2365 = vld [vmem:[%s7 + $0x10] sm:$0xff]
        %v2366 = vld [vmem:[%s7 + $0x18] sm:$0xff]
        %v2367 = vld [vmem:[%s7 + $0x20] sm:$0xff]
        %v2368 = vld [vmem:[%s7 + $0x28] sm:$0xff]
        %v2369 = vld [vmem:[%s7 + $0x30] sm:$0xff]
        %v2370 = vld [vmem:[%s7 + $0x38] sm:$0xff]
        %v2371 = vld [vmem:[%s8] sm:$0x1]
        %v2373 = vsel %vm789, %v2360, 0
        %2375 = vmatprep.subr.mxu0 0.0
        %2376 = vmatpush1.msra.mxu0 0.0
        %2377 = vmatprep.subr.mxu0 0.0
        %2378 = vmatpush1.msra.mxu0 0.0
        %2379 = vmatprep.subr.mxu0 0.0
        %2380 = vmatpush1.msra.mxu0 0.0
        %2381 = vmatprep.subr.mxu0 0.0
        %2382 = vmatpush1.msra.mxu0 0.0
        %2383 = vmatprep.subr.mxu0 0.0
        %2384 = vmatpush1.msra.mxu0 0.0
        %2385 = vmatprep.subr.mxu0 0.0
        %2386 = vmatpush1.msra.mxu0 0.0
        %2387 = vmatprep.subr.mxu0 0.0
        %2388 = vmatpush1.msra.mxu0 0.0
        %2389 = vmatprep.subr.mxu0 0.0
        %2390 = vmatpush1.msra.mxu0 0.0
        %2391 = vmatprep.subr.mxu0 0.0
        %2392 = vmatpush1.msra.mxu0 %v2370
        %2393 = vmatprep.subr.mxu0 0.0
        %2394 = vmatpush1.msra.mxu0 %v2369
        %2395 = vmatprep.subr.mxu0 0.0
        %2396 = vmatpush1.msra.mxu0 %v2368
        %2397 = vmatprep.subr.mxu0 0.0
        %2398 = vmatpush1.msra.mxu0 %v2367
        %2399 = vmatprep.subr.mxu0 0.0
        %2400 = vmatpush1.msra.mxu0 %v2366
        %2401 = vmatprep.subr.mxu0 0.0
        %2402 = vmatpush1.msra.mxu0 %v2365
        %2403 = vmatprep.subr.mxu0 0.0
        %2404 = vmatpush1.msra.mxu0 %v2364
        %2405 = vmatprep.subr.mxu0 0.0
        %2406 = vmatpush1.msra.mxu0 %v2363
        %2407 = vmatprep.subr.mxu0 0.0
        %2408 = vmatpush2.msra.mxu0 0.0
        %2409 = vmatprep.subr.mxu0 0.0
        %2410 = vmatpush2.msra.mxu0 0.0
        %2411 = vmatprep.subr.mxu0 0.0
        %2412 = vmatpush2.msra.mxu0 0.0
        %2413 = vmatprep.subr.mxu0 0.0
        %2414 = vmatpush2.msra.mxu0 0.0
        %2415 = vmatprep.subr.mxu0 0.0
        %2416 = vmatpush2.msra.mxu0 0.0
        %2417 = vmatprep.subr.mxu0 0.0
        %2418 = vmatpush2.msra.mxu0 0.0
        %2419 = vmatprep.subr.mxu0 0.0
        %2420 = vmatpush2.msra.mxu0 0.0
        %2421 = vmatprep.subr.mxu0 0.0
        %2422 = vmatpush2.msra.mxu0 0.0
        %2423 = vmatprep.subr.mxu0 0.0
        %2424 = vmatpush2.msra.mxu0 0.0
        %2425 = vmatprep.subr.mxu0 0.0
        %2426 = vmatpush2.msra.mxu0 0.0
        %2427 = vmatprep.subr.mxu0 0.0
        %2428 = vmatpush2.msra.mxu0 0.0
        %2429 = vmatprep.subr.mxu0 0.0
        %2430 = vmatpush2.msra.mxu0 0.0
        %2431 = vmatprep.subr.mxu0 0.0
        %2432 = vmatpush2.msra.mxu0 0.0
        %2433 = vmatprep.subr.mxu0 0.0
        %2434 = vmatpush2.msra.mxu0 0.0
        %2435 = vmatprep.subr.mxu0 0.0
        %2436 = vmatpush2.msra.mxu0 0.0
        %2437 = vmatprep.subr.mxu0 0.0
        %2438 = vmatpush2.msra.mxu0 0.0
        %2439 = vmatprep.mubr.f32.mxu0 0.0
        %2440 = vmatmul.mubr.f32.gmra.mxu0 %v2373
        %v2441 = vpop.f32.mrf.mxu0
        %v2442 = vadd.f32 %v2371, %v2441
        %v2443 = vpop.f32.mrf.mxu0
        %2444 = vdwg.mxu0
        %v2445 = vmax.f32 %v2442, 0.0
        %v2446 = vld [vmem:[%s9] sm:$0xff]
        %v2447 = vld [vmem:[%s9 + $0x8] sm:$0xff]
        %v2448 = vld [vmem:[%s9 + $0x10] sm:$0xff]
        %v2449 = vld [vmem:[%s9 + $0x18] sm:$0xff]
        %v2450 = vld [vmem:[%s9 + $0x20] sm:$0xff]
        %v2451 = vld [vmem:[%s9 + $0x28] sm:$0xff]
        %v2452 = vld [vmem:[%s9 + $0x30] sm:$0xff]
        %v2453 = vld [vmem:[%s9 + $0x38] sm:$0xff]
        %v2454 = vld [vmem:[%s9 + $0x40] sm:$0xff]
        %v2455 = vld [vmem:[%s9 + $0x48] sm:$0xff]
        %v2456 = vld [vmem:[%s9 + $0x50] sm:$0xff]
        %v2457 = vld [vmem:[%s9 + $0x58] sm:$0xff]
        %v2458 = vld [vmem:[%s9 + $0x60] sm:$0xff]
        %v2459 = vld [vmem:[%s9 + $0x68] sm:$0xff]
        %v2460 = vld [vmem:[%s9 + $0x70] sm:$0xff]
        %v2461 = vld [vmem:[%s9 + $0x78] sm:$0xff]
        %v2462 = vld [vmem:[%s10] sm:$0x1]
        %2463 = vmatprep.subr.mxu0 0.0
        %2464 = vmatpush1.msra.mxu0 %v2461
        %2465 = vmatprep.subr.mxu0 0.0
        %2466 = vmatpush1.msra.mxu0 %v2460
        %2467 = vmatprep.subr.mxu0 0.0
        %2468 = vmatpush1.msra.mxu0 %v2459
        %2469 = vmatprep.subr.mxu0 0.0
        %2470 = vmatpush1.msra.mxu0 %v2458
        %2471 = vmatprep.subr.mxu0 0.0
        %2472 = vmatpush1.msra.mxu0 %v2457
        %2473 = vmatprep.subr.mxu0 0.0
        %2474 = vmatpush1.msra.mxu0 %v2456
        %2475 = vmatprep.subr.mxu0 0.0
        %2476 = vmatpush1.msra.mxu0 %v2455
        %2477 = vmatprep.subr.mxu0 0.0
        %2478 = vmatpush1.msra.mxu0 %v2454
        %2479 = vmatprep.subr.mxu0 0.0
        %2480 = vmatpush1.msra.mxu0 %v2453
        %2481 = vmatprep.subr.mxu0 0.0
        %2482 = vmatpush1.msra.mxu0 %v2452
        %2483 = vmatprep.subr.mxu0 0.0
        %2484 = vmatpush1.msra.mxu0 %v2451
        %2485 = vmatprep.subr.mxu0 0.0
        %2486 = vmatpush1.msra.mxu0 %v2450
        %2487 = vmatprep.subr.mxu0 0.0
        %2488 = vmatpush1.msra.mxu0 %v2449
        %2489 = vmatprep.subr.mxu0 0.0
        %2490 = vmatpush1.msra.mxu0 %v2448
        %2491 = vmatprep.subr.mxu0 0.0
        %2492 = vmatpush1.msra.mxu0 %v2447
        %2493 = vmatprep.subr.mxu0 0.0
        %2494 = vmatpush1.msra.mxu0 %v2446
        %2495 = vmatprep.subr.mxu0 0.0
        %2496 = vmatpush2.msra.mxu0 0.0
        %2497 = vmatprep.subr.mxu0 0.0
        %2498 = vmatpush2.msra.mxu0 0.0
        %2499 = vmatprep.subr.mxu0 0.0
        %2500 = vmatpush2.msra.mxu0 0.0
        %2501 = vmatprep.subr.mxu0 0.0
        %2502 = vmatpush2.msra.mxu0 0.0
        %2503 = vmatprep.subr.mxu0 0.0
        %2504 = vmatpush2.msra.mxu0 0.0
        %2505 = vmatprep.subr.mxu0 0.0
        %2506 = vmatpush2.msra.mxu0 0.0
        %2507 = vmatprep.subr.mxu0 0.0
        %2508 = vmatpush2.msra.mxu0 0.0
        %2509 = vmatprep.subr.mxu0 0.0
        %2510 = vmatpush2.msra.mxu0 0.0
        %2511 = vmatprep.subr.mxu0 0.0
        %2512 = vmatpush2.msra.mxu0 0.0
        %2513 = vmatprep.subr.mxu0 0.0
        %2514 = vmatpush2.msra.mxu0 0.0
        %2515 = vmatprep.subr.mxu0 0.0
        %2516 = vmatpush2.msra.mxu0 0.0
        %2517 = vmatprep.subr.mxu0 0.0
        %2518 = vmatpush2.msra.mxu0 0.0
        %2519 = vmatprep.subr.mxu0 0.0
        %2520 = vmatpush2.msra.mxu0 0.0
        %2521 = vmatprep.subr.mxu0 0.0
        %2522 = vmatpush2.msra.mxu0 0.0
        %2523 = vmatprep.subr.mxu0 0.0
        %2524 = vmatpush2.msra.mxu0 0.0
        %2525 = vmatprep.subr.mxu0 0.0
        %2526 = vmatpush2.msra.mxu0 0.0
        %2527 = vmatprep.mubr.f32.mxu0 0.0
        %2528 = vmatmul.mubr.f32.gmra.mxu0 %v2445
        %v2529 = vpop.f32.mrf.mxu0
        %v2530 = vadd.f32 %v2462, %v2529
        %v2531 = vpop.f32.mrf.mxu0
        %2532 = vdwg.mxu0
        %2533 = vst [vmem:[%s378] sm:$0x1] %v2530
        %s2534 = sand.u32 %s269, 1
        %s2535 = scalar_lea.sflag [#allocation3], %s2534
        %s2536 = sand.u32 %s269, 1
        %s2537 = scalar_lea.vmem [#allocation2], %s2536
        // Predicated region
        $region65: #{simple_cnn_forward.1} parent=63 // pred_check
          %p2538 = pneg %p279
        $region66: #{simple_cnn_forward.1} parent=63 // pred_check_branch
          %2540 = sbr.rel (%p2538) target = $region68
        $region67: #{simple_cnn_forward.1} parent=63 // pred_region
          %s2542 = ssub.s32 16, 16
          %2543 = vsyncadd %s2535, %s2542
          %s2544 = smul.addr %s25, 16
          %s2545 = scalar_lea.hbm %s11, %s2544
          %s2547 = sshll.u32 %s2537, 4
          %s2548 = int_to_ptr.vmem [resolvable:$true] %s2547
          %2550 = dma.vmem_to_hbm [thread:$0]  %s2548, 16, %s2545, %s2535
        $region68: #{simple_cnn_forward.1} parent=63 // pred_fallthru
          _
      $region64: #{simple_cnn_forward.1} parent=5 // pred_fallthru
        _
      %p2551 = scmp.le.s32.totalorder 2, %s20
      // Predicated region
      $region69: #{simple_cnn_forward.1} parent=5 // pred_check
        %p2552 = pneg %p2551
      $region70: #{simple_cnn_forward.1} parent=5 // pred_check_branch
        %2554 = sbr.rel (%p2552) target = $region72
      $region71: #{simple_cnn_forward.1} parent=5 // pred_region
        %s2555 = ssub.s32 %s20, 2
        // Predicated region
        $region73: #{simple_cnn_forward.1} parent=71 // pred_check
          %p2556 = pneg %p285
        $region74: #{simple_cnn_forward.1} parent=71 // pred_check_branch
          %2558 = sbr.rel (%p2556) target = $region76
        $region75: #{simple_cnn_forward.1} parent=71 // pred_region
          %s2559 = sand.u32 %s270, 1
          %s2560 = scalar_lea.sflag [#allocation3], %s2559
          %s2561 = sand.u32 %s270, 1
          %s2562 = scalar_lea.vmem [#allocation2], %s2561
          %2563 = dma.done %s2560, 16
        $region76: #{simple_cnn_forward.1} parent=71 // pred_fallthru
          _
      $region72: #{simple_cnn_forward.1} parent=5 // pred_fallthru
        _
    $region6: #{simple_cnn_forward.1} parent=1 // loop_footer
      %s24 = sadd.s32 1, %s20
    $region7: #{simple_cnn_forward.1} parent=1 // loop_footer_branch
      %19 = sbr.rel target = $region3
    $region8: #{simple_cnn_forward.1} parent=1 // loop_exit
      _
    %2564 = vsyncpa [#allocation3], 1
    %s2565 = scalar_lea.sflag [#allocation3], 1
    %2566 = vsyncpa %s2565, 1

</llo_original>
